<compile_context>
chip_gen: v6e
topology: v6e:2x2x1
jax: 0.10.0
libtpu: 0.0.40
codegen_flags: <defaults>
</compile_context>

<pallas_src>
import jax
import jax.numpy as jnp
from jax import lax
from jax.experimental import pallas as pl
from jax.experimental.pallas import tpu as pltpu

PAD_INDEX = 0

# Small, shape-consistent hyperparameters (real module uses H=da=r=H1=100, H2=500).
V, D, H, DA, R, H1, H2 = 32, 16, 16, 16, 16, 16, 32
B, T = 2, 8


# ----------------------------------------------------------------------------
# Kernel 1: bidirectional LSTM, x & y folded into batch, time-major layout
# ----------------------------------------------------------------------------
def bilstm_kernel(x_ref, maskf_ref, w_ih_ref, w_hh_ref, b_ref, out_ref):
    # x_ref:     (T, 2B, D)       time-major embeddings
    # maskf_ref: (2B, T*2H)       lane-dense PAD mask (pre-broadcast in wrapper)
    # w_ih_ref:  (D, 8H) = [W_ih_fwd | W_ih_bwd], gate order i,f,g,o per dir
    # w_hh_ref:  (2H, 8H)         block-diagonal [[W_hh_fwd, 0], [0, W_hh_bwd]]
    # b_ref:     (1, 8H)          (= b_ih + b_hh when porting real LSTM weights)
    # out_ref:   (2B, T*2H)       lane-dense, PAD-masked biLSTM output
    Tk, B2, Dk = x_ref.shape
    Hk = w_hh_ref.shape[0] // 2
    G4 = 4 * Hk

    w_hh = w_hh_ref[...]

    # --- Hoisted input projection: one well-shaped MXU matmul + bias. -------
    gx = (jnp.dot(x_ref[...].reshape(Tk * B2, Dk), w_ih_ref[...],
                  preferred_element_type=jnp.float32)
          + b_ref[...])                                   # (T*2B, 8H)
    gx = gx.reshape(Tk, B2, 8 * Hk)                       # gx[s] = whole vregs

    def cell(gates, c):
        i_g = jax.nn.sigmoid(gates[:, 0:Hk])
        f_g = jax.nn.sigmoid(gates[:, Hk:2 * Hk])
        g_g = jnp.tanh(gates[:, 2 * Hk:3 * Hk])
        o_g = jax.nn.sigmoid(gates[:, 3 * Hk:4 * Hk])
        c_new = f_g * c + i_g * g_g
        return o_g * jnp.tanh(c_new), c_new

    z = jnp.zeros((B2, Hk), jnp.float32)
    h_f, c_f, h_b, c_b = z, z, z, z
    hf = [None] * Tk
    hb = [None] * Tk
    # Fully unrolled (static T): per-step hidden states stay in registers, no
    # scratch round-trip.  TODO(synk): for long real sequences chunk T via an
    # "arbitrary" grid axis with (h, c) carried in VMEM scratch instead.
    for s in range(Tk):
        t_b = Tk - 1 - s
        # Single recurrent matmul for both directions (block-diagonal W_hh).
        hh = jnp.dot(jnp.concatenate([h_f, h_b], axis=1), w_hh,
                     preferred_element_type=jnp.float32)  # (2B, 8H)
        g_f = gx[s, :, 0:G4] + hh[:, 0:G4]
        g_b = gx[t_b, :, G4:2 * G4] + hh[:, G4:2 * G4]
        h_f, c_f = cell(g_f, c_f)
        h_b, c_b = cell(g_b, c_b)
        hf[s] = h_f
        hb[t_b] = h_b

    # One lane-dense bulk store of the whole (2B, T*2H) output, PAD mask folded in.
    out = jnp.concatenate(
        [jnp.concatenate([hf[t], hb[t]], axis=-1) for t in range(Tk)], axis=-1)
    out_ref[...] = out * maskf_ref[...]


# ----------------------------------------------------------------------------
# Kernel 2: structured self-attention + comparison MLP head (x & y together)
# ----------------------------------------------------------------------------
def attn_mlp_kernel(h_ref, w1_ref, w2_ref,
                    wmul_ref, bmul_ref, wmax_ref, bmax_ref,
                    wsub_ref, bsub_ref, wrep_ref, brep_ref,
                    wfc1_ref, bfc1_ref, wout_ref, bout_ref,
                    out_ref):
    B2, Tk, H2x = h_ref.shape            # h_ref: (2B, T, 2H), already PAD-masked
    Bk = B2 // 2

    o = h_ref[...]
    # Attention over x and y rows at once (one pass over w_att1/w_att2).
    a = jnp.tanh(jnp.dot(o.reshape(B2 * Tk, H2x), w1_ref[...],
                         preferred_element_type=jnp.float32))
    a = jnp.dot(a, w2_ref[...], preferred_element_type=jnp.float32)   # (2B*T, r)
    a = jax.nn.softmax(a.reshape(B2, Tk, -1), axis=1)    # softmax over time axis
    rep = jnp.einsum('btr,btd->brd', a, o,
                     preferred_element_type=jnp.float32)               # (2B, r, 2H)
    rep = jax.nn.relu(rep.reshape(B2, -1))                             # (2B, 2rH)
    x_rep = rep[:Bk]
    y_rep = rep[Bk:]

    def fc(v, w_ref, b_ref):
        # TODO(synk): at real sizes stream these (2rH, H1) weights in
        # contraction tiles (bf16 / int8 / fp8) with a VMEM accumulator.
        return jnp.dot(v, w_ref[...], preferred_element_type=jnp.float32) + b_ref[...]

    mul_rep = fc(x_rep * y_rep, wmul_ref, bmul_ref)
    sub_rep = fc(jnp.abs(x_rep - y_rep), wsub_ref, bsub_ref)
    max_rep = fc(jnp.maximum(x_rep, y_rep), wmax_ref, bmax_ref)
    # Merged x/y 'rep' projection: one (2B, 2rH) @ (2rH, H1) pass over w_rep.
    xy_r = fc(rep, wrep_ref, brep_ref)
    x_r = xy_r[:Bk]
    y_r = xy_r[Bk:]

    z = jax.nn.relu(jnp.concatenate([mul_rep, sub_rep, max_rep, x_r, y_r], axis=1))
    z = jax.nn.relu(fc(z, wfc1_ref, bfc1_ref))
    out_ref[...] = fc(z, wout_ref, bout_ref)


# ----------------------------------------------------------------------------
# pallas_call wrappers
# ----------------------------------------------------------------------------
def _full_spec(shape):
    nd = len(shape)
    return pl.BlockSpec(shape, lambda i, _nd=nd: (0,) * _nd)


def pack_lstm_weights(p):
    """Pack per-direction LSTM weights into the fused-kernel layout."""
    Hk = p['whh_f'].shape[0]
    w_ih = jnp.concatenate([p['wih_f'], p['wih_b']], axis=1)       # (D, 8H)
    zeros = jnp.zeros((Hk, 4 * Hk), jnp.float32)
    w_hh = jnp.concatenate([
        jnp.concatenate([p['whh_f'], zeros], axis=1),
        jnp.concatenate([zeros, p['whh_b']], axis=1),
    ], axis=0)                                                     # (2H, 8H) block-diag
    b = jnp.concatenate([p['b_f'], p['b_b']], axis=1)              # (1, 8H)
    return w_ih, w_hh, b


def bilstm_pallas(x_tm, mask_flat, w_ih, w_hh, b):
    Tk, B2, Dk = x_tm.shape
    Hk = w_hh.shape[0] // 2
    out_shape = (B2, Tk * 2 * Hk)
    flops = (2 * Tk * B2 * Dk * 8 * Hk            # hoisted input projection
             + Tk * 2 * B2 * 2 * Hk * 8 * Hk)     # recurrent matmuls
    transcendentals = 10 * B2 * Tk * Hk           # sigmoid / tanh per cell
    bytes_accessed = 4 * (x_tm.size + mask_flat.size + w_ih.size + w_hh.size
                          + b.size + out_shape[0] * out_shape[1])
    return pl.pallas_call(
        bilstm_kernel,
        out_shape=jax.ShapeDtypeStruct(out_shape, jnp.float32),
        grid=(1,),
        in_specs=[_full_spec(a.shape) for a in (x_tm, mask_flat, w_ih, w_hh, b)],
        out_specs=_full_spec(out_shape),
        compiler_params=pltpu.CompilerParams(
            dimension_semantics=("arbitrary",)),
        cost_estimate=pl.CostEstimate(flops=flops,
                                      transcendentals=transcendentals,
                                      bytes_accessed=bytes_accessed),
    )(x_tm, mask_flat, w_ih, w_hh, b)


def attn_mlp_pallas(h, p):
    B2, Tk, H2x = h.shape
    Bk = B2 // 2
    args = (h, p['w_att1'], p['w_att2'],
            p['w_mul'], p['b_mul'], p['w_max'], p['b_max'],
            p['w_sub'], p['b_sub'], p['w_rep'], p['b_rep'],
            p['w_fc1'], p['b_fc1'], p['w_out'], p['b_out'])
    da = p['w_att1'].shape[1]
    r = p['w_att2'].shape[1]
    h1 = p['w_mul'].shape[1]
    h2 = p['w_fc1'].shape[1]
    flops = (2 * B2 * Tk * H2x * da
             + 2 * B2 * Tk * da * r
             + 2 * B2 * Tk * r * H2x
             + 2 * (3 * Bk + B2) * p['w_mul'].shape[0] * h1
             + 2 * Bk * 5 * h1 * h2
             + 2 * Bk * h2 * 2)
    transcendentals = B2 * Tk * (da + r)
    bytes_accessed = 4 * (sum(a.size for a in args) + Bk * 2)
    return pl.pallas_call(
        attn_mlp_kernel,
        out_shape=jax.ShapeDtypeStruct((Bk, 2), jnp.float32),
        grid=(1,),
        in_specs=[_full_spec(a.shape) for a in args],
        out_specs=_full_spec((Bk, 2)),
        compiler_params=pltpu.CompilerParams(
            dimension_semantics=("arbitrary",)),
        cost_estimate=pl.CostEstimate(flops=flops,
                                      transcendentals=transcendentals,
                                      bytes_accessed=bytes_accessed),
    )(*args)


def self_attention_bilstm_forward(x_ids, y_ids, params):
    # TODO(synk): embedding gather kept as jnp.take glue (an in-kernel DMA /
    # scalar-prefetch gather is only a modest win at these sizes).
    ids = jnp.concatenate([x_ids, y_ids], axis=0)                  # (2B, T)
    B2, Tk = ids.shape
    Hk = params['whh_f'].shape[0]

    emb = jnp.take(params['embed'], ids, axis=0)                   # (2B, T, D)
    x_tm = jnp.transpose(emb, (1, 0, 2))                           # (T, 2B, D)
    mask = (ids != PAD_INDEX).astype(jnp.float32)                  # (2B, T)
    mask_flat = jnp.broadcast_to(
        mask[:, :, None], (B2, Tk, 2 * Hk)).reshape(B2, Tk * 2 * Hk)

    w_ih, w_hh, b = pack_lstm_weights(params)
    h_flat = bilstm_pallas(x_tm, mask_flat, w_ih, w_hh, b)         # (2B, T*2H)
    h = h_flat.reshape(B2, Tk, 2 * Hk)                             # free reshape
    return attn_mlp_pallas(h, params)                              # (B, 2)


# ----------------------------------------------------------------------------
# Pure-JAX reference (same math) for verification
# ----------------------------------------------------------------------------
def _lstm_dir_ref(emb, wih, whh, b, reverse):
    Bk, Tk, _ = emb.shape
    Hk = whh.shape[0]

    def step(carry, x_t):
        h, c = carry
        gates = x_t @ wih + h @ whh + b
        i_g = jax.nn.sigmoid(gates[:, 0:Hk])
        f_g = jax.nn.sigmoid(gates[:, Hk:2 * Hk])
        g_g = jnp.tanh(gates[:, 2 * Hk:3 * Hk])
        o_g = jax.nn.sigmoid(gates[:, 3 * Hk:4 * Hk])
        c = f_g * c + i_g * g_g
        h = o_g * jnp.tanh(c)
        return (h, c), h

    xs = jnp.swapaxes(emb, 0, 1)
    if reverse:
        xs = xs[::-1]
    _, hs = lax.scan(step, (jnp.zeros((Bk, Hk)), jnp.zeros((Bk, Hk))), xs)
    if reverse:
        hs = hs[::-1]
    return jnp.swapaxes(hs, 0, 1)


def reference_forward(x_ids, y_ids, p):
    x_emb = jnp.take(p['embed'], x_ids, axis=0)
    y_emb = jnp.take(p['embed'], y_ids, axis=0)
    x_mask = (x_ids != PAD_INDEX).astype(jnp.float32)[:, :, None]
    y_mask = (y_ids != PAD_INDEX).astype(jnp.float32)[:, :, None]

    def bilstm(emb):
        hf = _lstm_dir_ref(emb, p['wih_f'], p['whh_f'], p['b_f'], False)
        hb = _lstm_dir_ref(emb, p['wih_b'], p['whh_b'], p['b_b'], True)
        return jnp.concatenate([hf, hb], axis=-1)

    xo = bilstm(x_emb) * x_mask
    yo = bilstm(y_emb) * y_mask

    def represent(o):
        Bk, Tk, H2x = o.shape
        a = jnp.tanh(o.reshape(Bk * Tk, H2x) @ p['w_att1']) @ p['w_att2']
        a = jnp.swapaxes(a.reshape(Bk, Tk, -1), 1, 2)
        a = jax.nn.softmax(a, axis=-1)
        rep = jnp.einsum('brt,btd->brd', a, o)
        return jax.nn.relu(rep.reshape(Bk, -1))

    xr, yr = represent(xo), represent(yo)
    mul_rep = (xr * yr) @ p['w_mul'] + p['b_mul']
    sub_rep = jnp.abs(xr - yr) @ p['w_sub'] + p['b_sub']
    max_rep = jnp.maximum(xr, yr) @ p['w_max'] + p['b_max']
    x_r = xr @ p['w_rep'] + p['b_rep']
    y_r = yr @ p['w_rep'] + p['b_rep']
    z = jax.nn.relu(jnp.concatenate([mul_rep, sub_rep, max_rep, x_r, y_r], axis=1))
    z = jax.nn.relu(z @ p['w_fc1'] + p['b_fc1'])
    return z @ p['w_out'] + p['b_out']


# ----------------------------------------------------------------------------
# Deterministic parameter construction
# ----------------------------------------------------------------------------
def make_params(key):
    ks = jax.random.split(key, 24)

    def uni(k, shape, scale=0.1):
        return jax.random.uniform(k, shape, jnp.float32, -scale, scale)

    p = {
        'embed': uni(ks[0], (V, D), 0.5),
        'wih_f': uni(ks[1], (D, 4 * H)),
        'whh_f': uni(ks[2], (H, 4 * H)),
        'b_f':   uni(ks[3], (1, 4 * H)),
        'wih_b': uni(ks[4], (D, 4 * H)),
        'whh_b': uni(ks[5], (H, 4 * H)),
        'b_b':   uni(ks[6], (1, 4 * H)),
        'w_att1': uni(ks[7], (2 * H, DA), 0.05),
        'w_att2': uni(ks[8], (DA, R), 0.05),
        'w_mul': uni(ks[9],  (2 * R * H, H1), 0.02),
        'b_mul': uni(ks[10], (1, H1), 0.02),
        'w_max': uni(ks[11], (2 * R * H, H1), 0.02),
        'b_max': uni(ks[12], (1, H1), 0.02),
        'w_sub': uni(ks[13], (2 * R * H, H1), 0.02),
        'b_sub': uni(ks[14], (1, H1), 0.02),
        'w_rep': uni(ks[15], (2 * R * H, H1), 0.02),
        'b_rep': uni(ks[16], (1, H1), 0.02),
        'w_fc1': uni(ks[17], (5 * H1, H2), 0.05),
        'b_fc1': uni(ks[18], (1, H2), 0.05),
        'w_out': uni(ks[19], (H2, 2), 0.05),
        'b_out': uni(ks[20], (1, 2), 0.05),
    }
    return p


if __name__ == "__main__":
    key = jax.random.PRNGKey(0)
    kx, ky, kp = jax.random.split(key, 3)

    x_ids = jax.random.randint(kx, (B, T), 1, V).astype(jnp.int32)
    y_ids = jax.random.randint(ky, (B, T), 1, V).astype(jnp.int32)
    # Trailing padding to exercise the PAD mask path.
    x_ids = x_ids.at[:, 6:].set(PAD_INDEX)
    y_ids = y_ids.at[:, 5:].set(PAD_INDEX)

    params = make_params(kp)

    logits = self_attention_bilstm_forward(x_ids, y_ids, params)
    logits = jax.block_until_ready(logits)

    ref = jax.block_until_ready(reference_forward(x_ids, y_ids, params))
    assert logits.shape == (B, 2)
    assert jnp.allclose(logits, ref, atol=1e-4, rtol=1e-4), (logits, ref)

    print("KERNEL_OK")
</pallas_src>

<mosaic_0001>
module attributes {stable_mosaic.version = 11 : i64} {
  func.func @bilstm_kernel(%arg0: i32, %arg1: memref<8x4x16xf32, #tpu.memory_space<vmem>>, %arg2: memref<4x256xf32, #tpu.memory_space<vmem>>, %arg3: memref<16x128xf32, #tpu.memory_space<vmem>>, %arg4: memref<32x128xf32, #tpu.memory_space<vmem>>, %arg5: memref<1x128xf32, #tpu.memory_space<vmem>>, %arg6: memref<4x256xf32, #tpu.memory_space<vmem>>) attributes {dimension_semantics = [#tpu.dimension_semantics<arbitrary>], iteration_bounds = array<i64: 1>, scalar_prefetch = 0 : i64, scratch_operands = 0 : i64, tpu.core_type = #tpu.core_type<tc>, window_params = [{pipeline_mode = #tpu.pipeline_mode<synchronous>, transform_indices = @transform_0, window_bounds = array<i64: 8, 4, 16>}, {pipeline_mode = #tpu.pipeline_mode<synchronous>, transform_indices = @transform_1, window_bounds = array<i64: 4, 256>}, {pipeline_mode = #tpu.pipeline_mode<synchronous>, transform_indices = @transform_2, window_bounds = array<i64: 16, 128>}, {pipeline_mode = #tpu.pipeline_mode<synchronous>, transform_indices = @transform_3, window_bounds = array<i64: 32, 128>}, {pipeline_mode = #tpu.pipeline_mode<synchronous>, transform_indices = @transform_4, window_bounds = array<i64: 1, 128>}, {pipeline_mode = #tpu.pipeline_mode<synchronous>, transform_indices = @transform_5, window_bounds = array<i64: 4, 256>}]} {
    %c0 = arith.constant 0 : index
    %c0_0 = arith.constant 0 : index
    %0 = vector.load %arg4[%c0, %c0_0] : memref<32x128xf32, #tpu.memory_space<vmem>>, vector<32x128xf32>
    %c0_1 = arith.constant 0 : index
    %c0_2 = arith.constant 0 : index
    %c0_3 = arith.constant 0 : index
    %1 = vector.load %arg1[%c0_1, %c0_2, %c0_3] : memref<8x4x16xf32, #tpu.memory_space<vmem>>, vector<8x4x16xf32>
    %2 = vector.shape_cast %1 : vector<8x4x16xf32> to vector<32x16xf32>
    %c0_4 = arith.constant 0 : index
    %c0_5 = arith.constant 0 : index
    %3 = vector.load %arg3[%c0_4, %c0_5] : memref<16x128xf32, #tpu.memory_space<vmem>>, vector<16x128xf32>
    %cst = arith.constant dense<0.000000e+00> : vector<32x128xf32>
    %4 = tpu.matmul %2, %3, %cst {dimension_numbers = #tpu.dot_dimension_numbers<[1], [0], [0], [1], [0, 0, 1, 1], [], []>} : vector<32x16xf32>, vector<16x128xf32>, vector<32x128xf32> -> vector<32x128xf32>
    %c0_6 = arith.constant 0 : index
    %c0_7 = arith.constant 0 : index
    %5 = vector.load %arg5[%c0_6, %c0_7] : memref<1x128xf32, #tpu.memory_space<vmem>>, vector<1x128xf32>
    %6 = vector.broadcast %5 : vector<1x128xf32> to vector<32x128xf32>
    %7 = arith.addf %4, %6 : vector<32x128xf32>
    %8 = vector.shape_cast %7 : vector<32x128xf32> to vector<8x4x128xf32>
    %cst_8 = arith.constant 0.000000e+00 : f32
    %9 = vector.broadcast %cst_8 : f32 to vector<4x16xf32>
    %10 = tpu.concatenate %9, %9 in 1 : vector<4x16xf32>, vector<4x16xf32> -> vector<4x32xf32>
    %cst_9 = arith.constant dense<0.000000e+00> : vector<4x128xf32>
    %11 = tpu.matmul %10, %0, %cst_9 {dimension_numbers = #tpu.dot_dimension_numbers<[1], [0], [0], [1], [0, 0, 1, 1], [], []>} : vector<4x32xf32>, vector<32x128xf32>, vector<4x128xf32> -> vector<4x128xf32>
    %12 = vector.extract_strided_slice %8 {offsets = [0, 0, 0], sizes = [1, 4, 64], strides = [1, 1, 1]} : vector<8x4x128xf32> to vector<1x4x64xf32>
    %13 = vector.shape_cast %12 : vector<1x4x64xf32> to vector<4x64xf32>
    %14 = vector.extract_strided_slice %11 {offsets = [0, 0], sizes = [4, 64], strides = [1, 1]} : vector<4x128xf32> to vector<4x64xf32>
    %15 = arith.addf %13, %14 : vector<4x64xf32>
    %16 = vector.extract_strided_slice %8 {offsets = [7, 0, 64], sizes = [1, 4, 64], strides = [1, 1, 1]} : vector<8x4x128xf32> to vector<1x4x64xf32>
    %17 = vector.shape_cast %16 : vector<1x4x64xf32> to vector<4x64xf32>
    %18 = vector.extract_strided_slice %11 {offsets = [0, 64], sizes = [4, 64], strides = [1, 1]} : vector<4x128xf32> to vector<4x64xf32>
    %19 = arith.addf %17, %18 : vector<4x64xf32>
    %20 = vector.extract_strided_slice %15 {offsets = [0, 0], sizes = [4, 16], strides = [1, 1]} : vector<4x64xf32> to vector<4x16xf32>
    %21 = arith.negf %20 : vector<4x16xf32>
    %22 = math.exp %21 : vector<4x16xf32>
    %cst_10 = arith.constant 1.000000e+00 : f32
    %23 = vector.broadcast %cst_10 : f32 to vector<4x16xf32>
    %24 = arith.addf %23, %22 : vector<4x16xf32>
    %25 = arith.divf %23, %24 : vector<4x16xf32>
    %26 = vector.extract_strided_slice %15 {offsets = [0, 16], sizes = [4, 16], strides = [1, 1]} : vector<4x64xf32> to vector<4x16xf32>
    %27 = arith.negf %26 : vector<4x16xf32>
    %28 = math.exp %27 : vector<4x16xf32>
    %cst_11 = arith.constant 1.000000e+00 : f32
    %29 = vector.broadcast %cst_11 : f32 to vector<4x16xf32>
    %30 = arith.addf %29, %28 : vector<4x16xf32>
    %31 = arith.divf %29, %30 : vector<4x16xf32>
    %32 = vector.extract_strided_slice %15 {offsets = [0, 32], sizes = [4, 16], strides = [1, 1]} : vector<4x64xf32> to vector<4x16xf32>
    %33 = math.tanh %32 : vector<4x16xf32>
    %34 = vector.extract_strided_slice %15 {offsets = [0, 48], sizes = [4, 16], strides = [1, 1]} : vector<4x64xf32> to vector<4x16xf32>
    %35 = arith.negf %34 : vector<4x16xf32>
    %36 = math.exp %35 : vector<4x16xf32>
    %cst_12 = arith.constant 1.000000e+00 : f32
    %37 = vector.broadcast %cst_12 : f32 to vector<4x16xf32>
    %38 = arith.addf %37, %36 : vector<4x16xf32>
    %39 = arith.divf %37, %38 : vector<4x16xf32>
    %40 = arith.mulf %31, %9 : vector<4x16xf32>
    %41 = arith.mulf %25, %33 : vector<4x16xf32>
    %42 = arith.addf %40, %41 : vector<4x16xf32>
    %43 = math.tanh %42 : vector<4x16xf32>
    %44 = arith.mulf %39, %43 : vector<4x16xf32>
    %45 = vector.extract_strided_slice %19 {offsets = [0, 0], sizes = [4, 16], strides = [1, 1]} : vector<4x64xf32> to vector<4x16xf32>
    %46 = arith.negf %45 : vector<4x16xf32>
    %47 = math.exp %46 : vector<4x16xf32>
    %cst_13 = arith.constant 1.000000e+00 : f32
    %48 = vector.broadcast %cst_13 : f32 to vector<4x16xf32>
    %49 = arith.addf %48, %47 : vector<4x16xf32>
    %50 = arith.divf %48, %49 : vector<4x16xf32>
    %51 = vector.extract_strided_slice %19 {offsets = [0, 16], sizes = [4, 16], strides = [1, 1]} : vector<4x64xf32> to vector<4x16xf32>
    %52 = arith.negf %51 : vector<4x16xf32>
    %53 = math.exp %52 : vector<4x16xf32>
    %cst_14 = arith.constant 1.000000e+00 : f32
    %54 = vector.broadcast %cst_14 : f32 to vector<4x16xf32>
    %55 = arith.addf %54, %53 : vector<4x16xf32>
    %56 = arith.divf %54, %55 : vector<4x16xf32>
    %57 = vector.extract_strided_slice %19 {offsets = [0, 32], sizes = [4, 16], strides = [1, 1]} : vector<4x64xf32> to vector<4x16xf32>
    %58 = math.tanh %57 : vector<4x16xf32>
    %59 = vector.extract_strided_slice %19 {offsets = [0, 48], sizes = [4, 16], strides = [1, 1]} : vector<4x64xf32> to vector<4x16xf32>
    %60 = arith.negf %59 : vector<4x16xf32>
    %61 = math.exp %60 : vector<4x16xf32>
    %cst_15 = arith.constant 1.000000e+00 : f32
    %62 = vector.broadcast %cst_15 : f32 to vector<4x16xf32>
    %63 = arith.addf %62, %61 : vector<4x16xf32>
    %64 = arith.divf %62, %63 : vector<4x16xf32>
    %65 = arith.mulf %56, %9 : vector<4x16xf32>
    %66 = arith.mulf %50, %58 : vector<4x16xf32>
    %67 = arith.addf %65, %66 : vector<4x16xf32>
    %68 = math.tanh %67 : vector<4x16xf32>
    %69 = arith.mulf %64, %68 : vector<4x16xf32>
    %70 = tpu.concatenate %44, %69 in 1 : vector<4x16xf32>, vector<4x16xf32> -> vector<4x32xf32>
    %cst_16 = arith.constant dense<0.000000e+00> : vector<4x128xf32>
    %71 = tpu.matmul %70, %0, %cst_16 {dimension_numbers = #tpu.dot_dimension_numbers<[1], [0], [0], [1], [0, 0, 1, 1], [], []>} : vector<4x32xf32>, vector<32x128xf32>, vector<4x128xf32> -> vector<4x128xf32>
    %72 = vector.extract_strided_slice %8 {offsets = [1, 0, 0], sizes = [1, 4, 64], strides = [1, 1, 1]} : vector<8x4x128xf32> to vector<1x4x64xf32>
    %73 = vector.shape_cast %72 : vector<1x4x64xf32> to vector<4x64xf32>
    %74 = vector.extract_strided_slice %71 {offsets = [0, 0], sizes = [4, 64], strides = [1, 1]} : vector<4x128xf32> to vector<4x64xf32>
    %75 = arith.addf %73, %74 : vector<4x64xf32>
    %76 = vector.extract_strided_slice %8 {offsets = [6, 0, 64], sizes = [1, 4, 64], strides = [1, 1, 1]} : vector<8x4x128xf32> to vector<1x4x64xf32>
    %77 = vector.shape_cast %76 : vector<1x4x64xf32> to vector<4x64xf32>
    %78 = vector.extract_strided_slice %71 {offsets = [0, 64], sizes = [4, 64], strides = [1, 1]} : vector<4x128xf32> to vector<4x64xf32>
    %79 = arith.addf %77, %78 : vector<4x64xf32>
    %80 = vector.extract_strided_slice %75 {offsets = [0, 0], sizes = [4, 16], strides = [1, 1]} : vector<4x64xf32> to vector<4x16xf32>
    %81 = arith.negf %80 : vector<4x16xf32>
    %82 = math.exp %81 : vector<4x16xf32>
    %cst_17 = arith.constant 1.000000e+00 : f32
    %83 = vector.broadcast %cst_17 : f32 to vector<4x16xf32>
    %84 = arith.addf %83, %82 : vector<4x16xf32>
    %85 = arith.divf %83, %84 : vector<4x16xf32>
    %86 = vector.extract_strided_slice %75 {offsets = [0, 16], sizes = [4, 16], strides = [1, 1]} : vector<4x64xf32> to vector<4x16xf32>
    %87 = arith.negf %86 : vector<4x16xf32>
    %88 = math.exp %87 : vector<4x16xf32>
    %cst_18 = arith.constant 1.000000e+00 : f32
    %89 = vector.broadcast %cst_18 : f32 to vector<4x16xf32>
    %90 = arith.addf %89, %88 : vector<4x16xf32>
    %91 = arith.divf %89, %90 : vector<4x16xf32>
    %92 = vector.extract_strided_slice %75 {offsets = [0, 32], sizes = [4, 16], strides = [1, 1]} : vector<4x64xf32> to vector<4x16xf32>
    %93 = math.tanh %92 : vector<4x16xf32>
    %94 = vector.extract_strided_slice %75 {offsets = [0, 48], sizes = [4, 16], strides = [1, 1]} : vector<4x64xf32> to vector<4x16xf32>
    %95 = arith.negf %94 : vector<4x16xf32>
    %96 = math.exp %95 : vector<4x16xf32>
    %cst_19 = arith.constant 1.000000e+00 : f32
    %97 = vector.broadcast %cst_19 : f32 to vector<4x16xf32>
    %98 = arith.addf %97, %96 : vector<4x16xf32>
    %99 = arith.divf %97, %98 : vector<4x16xf32>
    %100 = arith.mulf %91, %42 : vector<4x16xf32>
    %101 = arith.mulf %85, %93 : vector<4x16xf32>
    %102 = arith.addf %100, %101 : vector<4x16xf32>
    %103 = math.tanh %102 : vector<4x16xf32>
    %104 = arith.mulf %99, %103 : vector<4x16xf32>
    %105 = vector.extract_strided_slice %79 {offsets = [0, 0], sizes = [4, 16], strides = [1, 1]} : vector<4x64xf32> to vector<4x16xf32>
    %106 = arith.negf %105 : vector<4x16xf32>
    %107 = math.exp %106 : vector<4x16xf32>
    %cst_20 = arith.constant 1.000000e+00 : f32
    %108 = vector.broadcast %cst_20 : f32 to vector<4x16xf32>
    %109 = arith.addf %108, %107 : vector<4x16xf32>
    %110 = arith.divf %108, %109 : vector<4x16xf32>
    %111 = vector.extract_strided_slice %79 {offsets = [0, 16], sizes = [4, 16], strides = [1, 1]} : vector<4x64xf32> to vector<4x16xf32>
    %112 = arith.negf %111 : vector<4x16xf32>
    %113 = math.exp %112 : vector<4x16xf32>
    %cst_21 = arith.constant 1.000000e+00 : f32
    %114 = vector.broadcast %cst_21 : f32 to vector<4x16xf32>
    %115 = arith.addf %114, %113 : vector<4x16xf32>
    %116 = arith.divf %114, %115 : vector<4x16xf32>
    %117 = vector.extract_strided_slice %79 {offsets = [0, 32], sizes = [4, 16], strides = [1, 1]} : vector<4x64xf32> to vector<4x16xf32>
    %118 = math.tanh %117 : vector<4x16xf32>
    %119 = vector.extract_strided_slice %79 {offsets = [0, 48], sizes = [4, 16], strides = [1, 1]} : vector<4x64xf32> to vector<4x16xf32>
    %120 = arith.negf %119 : vector<4x16xf32>
    %121 = math.exp %120 : vector<4x16xf32>
    %cst_22 = arith.constant 1.000000e+00 : f32
    %122 = vector.broadcast %cst_22 : f32 to vector<4x16xf32>
    %123 = arith.addf %122, %121 : vector<4x16xf32>
    %124 = arith.divf %122, %123 : vector<4x16xf32>
    %125 = arith.mulf %116, %67 : vector<4x16xf32>
    %126 = arith.mulf %110, %118 : vector<4x16xf32>
    %127 = arith.addf %125, %126 : vector<4x16xf32>
    %128 = math.tanh %127 : vector<4x16xf32>
    %129 = arith.mulf %124, %128 : vector<4x16xf32>
    %130 = tpu.concatenate %104, %129 in 1 : vector<4x16xf32>, vector<4x16xf32> -> vector<4x32xf32>
    %cst_23 = arith.constant dense<0.000000e+00> : vector<4x128xf32>
    %131 = tpu.matmul %130, %0, %cst_23 {dimension_numbers = #tpu.dot_dimension_numbers<[1], [0], [0], [1], [0, 0, 1, 1], [], []>} : vector<4x32xf32>, vector<32x128xf32>, vector<4x128xf32> -> vector<4x128xf32>
    %132 = vector.extract_strided_slice %8 {offsets = [2, 0, 0], sizes = [1, 4, 64], strides = [1, 1, 1]} : vector<8x4x128xf32> to vector<1x4x64xf32>
    %133 = vector.shape_cast %132 : vector<1x4x64xf32> to vector<4x64xf32>
    %134 = vector.extract_strided_slice %131 {offsets = [0, 0], sizes = [4, 64], strides = [1, 1]} : vector<4x128xf32> to vector<4x64xf32>
    %135 = arith.addf %133, %134 : vector<4x64xf32>
    %136 = vector.extract_strided_slice %8 {offsets = [5, 0, 64], sizes = [1, 4, 64], strides = [1, 1, 1]} : vector<8x4x128xf32> to vector<1x4x64xf32>
    %137 = vector.shape_cast %136 : vector<1x4x64xf32> to vector<4x64xf32>
    %138 = vector.extract_strided_slice %131 {offsets = [0, 64], sizes = [4, 64], strides = [1, 1]} : vector<4x128xf32> to vector<4x64xf32>
    %139 = arith.addf %137, %138 : vector<4x64xf32>
    %140 = vector.extract_strided_slice %135 {offsets = [0, 0], sizes = [4, 16], strides = [1, 1]} : vector<4x64xf32> to vector<4x16xf32>
    %141 = arith.negf %140 : vector<4x16xf32>
    %142 = math.exp %141 : vector<4x16xf32>
    %cst_24 = arith.constant 1.000000e+00 : f32
    %143 = vector.broadcast %cst_24 : f32 to vector<4x16xf32>
    %144 = arith.addf %143, %142 : vector<4x16xf32>
    %145 = arith.divf %143, %144 : vector<4x16xf32>
    %146 = vector.extract_strided_slice %135 {offsets = [0, 16], sizes = [4, 16], strides = [1, 1]} : vector<4x64xf32> to vector<4x16xf32>
    %147 = arith.negf %146 : vector<4x16xf32>
    %148 = math.exp %147 : vector<4x16xf32>
    %cst_25 = arith.constant 1.000000e+00 : f32
    %149 = vector.broadcast %cst_25 : f32 to vector<4x16xf32>
    %150 = arith.addf %149, %148 : vector<4x16xf32>
    %151 = arith.divf %149, %150 : vector<4x16xf32>
    %152 = vector.extract_strided_slice %135 {offsets = [0, 32], sizes = [4, 16], strides = [1, 1]} : vector<4x64xf32> to vector<4x16xf32>
    %153 = math.tanh %152 : vector<4x16xf32>
    %154 = vector.extract_strided_slice %135 {offsets = [0, 48], sizes = [4, 16], strides = [1, 1]} : vector<4x64xf32> to vector<4x16xf32>
    %155 = arith.negf %154 : vector<4x16xf32>
    %156 = math.exp %155 : vector<4x16xf32>
    %cst_26 = arith.constant 1.000000e+00 : f32
    %157 = vector.broadcast %cst_26 : f32 to vector<4x16xf32>
    %158 = arith.addf %157, %156 : vector<4x16xf32>
    %159 = arith.divf %157, %158 : vector<4x16xf32>
    %160 = arith.mulf %151, %102 : vector<4x16xf32>
    %161 = arith.mulf %145, %153 : vector<4x16xf32>
    %162 = arith.addf %160, %161 : vector<4x16xf32>
    %163 = math.tanh %162 : vector<4x16xf32>
    %164 = arith.mulf %159, %163 : vector<4x16xf32>
    %165 = vector.extract_strided_slice %139 {offsets = [0, 0], sizes = [4, 16], strides = [1, 1]} : vector<4x64xf32> to vector<4x16xf32>
    %166 = arith.negf %165 : vector<4x16xf32>
    %167 = math.exp %166 : vector<4x16xf32>
    %cst_27 = arith.constant 1.000000e+00 : f32
    %168 = vector.broadcast %cst_27 : f32 to vector<4x16xf32>
    %169 = arith.addf %168, %167 : vector<4x16xf32>
    %170 = arith.divf %168, %169 : vector<4x16xf32>
    %171 = vector.extract_strided_slice %139 {offsets = [0, 16], sizes = [4, 16], strides = [1, 1]} : vector<4x64xf32> to vector<4x16xf32>
    %172 = arith.negf %171 : vector<4x16xf32>
    %173 = math.exp %172 : vector<4x16xf32>
    %cst_28 = arith.constant 1.000000e+00 : f32
    %174 = vector.broadcast %cst_28 : f32 to vector<4x16xf32>
    %175 = arith.addf %174, %173 : vector<4x16xf32>
    %176 = arith.divf %174, %175 : vector<4x16xf32>
    %177 = vector.extract_strided_slice %139 {offsets = [0, 32], sizes = [4, 16], strides = [1, 1]} : vector<4x64xf32> to vector<4x16xf32>
    %178 = math.tanh %177 : vector<4x16xf32>
    %179 = vector.extract_strided_slice %139 {offsets = [0, 48], sizes = [4, 16], strides = [1, 1]} : vector<4x64xf32> to vector<4x16xf32>
    %180 = arith.negf %179 : vector<4x16xf32>
    %181 = math.exp %180 : vector<4x16xf32>
    %cst_29 = arith.constant 1.000000e+00 : f32
    %182 = vector.broadcast %cst_29 : f32 to vector<4x16xf32>
    %183 = arith.addf %182, %181 : vector<4x16xf32>
    %184 = arith.divf %182, %183 : vector<4x16xf32>
    %185 = arith.mulf %176, %127 : vector<4x16xf32>
    %186 = arith.mulf %170, %178 : vector<4x16xf32>
    %187 = arith.addf %185, %186 : vector<4x16xf32>
    %188 = math.tanh %187 : vector<4x16xf32>
    %189 = arith.mulf %184, %188 : vector<4x16xf32>
    %190 = tpu.concatenate %164, %189 in 1 : vector<4x16xf32>, vector<4x16xf32> -> vector<4x32xf32>
    %cst_30 = arith.constant dense<0.000000e+00> : vector<4x128xf32>
    %191 = tpu.matmul %190, %0, %cst_30 {dimension_numbers = #tpu.dot_dimension_numbers<[1], [0], [0], [1], [0, 0, 1, 1], [], []>} : vector<4x32xf32>, vector<32x128xf32>, vector<4x128xf32> -> vector<4x128xf32>
    %192 = vector.extract_strided_slice %8 {offsets = [3, 0, 0], sizes = [1, 4, 64], strides = [1, 1, 1]} : vector<8x4x128xf32> to vector<1x4x64xf32>
    %193 = vector.shape_cast %192 : vector<1x4x64xf32> to vector<4x64xf32>
    %194 = vector.extract_strided_slice %191 {offsets = [0, 0], sizes = [4, 64], strides = [1, 1]} : vector<4x128xf32> to vector<4x64xf32>
    %195 = arith.addf %193, %194 : vector<4x64xf32>
    %196 = vector.extract_strided_slice %8 {offsets = [4, 0, 64], sizes = [1, 4, 64], strides = [1, 1, 1]} : vector<8x4x128xf32> to vector<1x4x64xf32>
    %197 = vector.shape_cast %196 : vector<1x4x64xf32> to vector<4x64xf32>
    %198 = vector.extract_strided_slice %191 {offsets = [0, 64], sizes = [4, 64], strides = [1, 1]} : vector<4x128xf32> to vector<4x64xf32>
    %199 = arith.addf %197, %198 : vector<4x64xf32>
    %200 = vector.extract_strided_slice %195 {offsets = [0, 0], sizes = [4, 16], strides = [1, 1]} : vector<4x64xf32> to vector<4x16xf32>
    %201 = arith.negf %200 : vector<4x16xf32>
    %202 = math.exp %201 : vector<4x16xf32>
    %cst_31 = arith.constant 1.000000e+00 : f32
    %203 = vector.broadcast %cst_31 : f32 to vector<4x16xf32>
    %204 = arith.addf %203, %202 : vector<4x16xf32>
    %205 = arith.divf %203, %204 : vector<4x16xf32>
    %206 = vector.extract_strided_slice %195 {offsets = [0, 16], sizes = [4, 16], strides = [1, 1]} : vector<4x64xf32> to vector<4x16xf32>
    %207 = arith.negf %206 : vector<4x16xf32>
    %208 = math.exp %207 : vector<4x16xf32>
    %cst_32 = arith.constant 1.000000e+00 : f32
    %209 = vector.broadcast %cst_32 : f32 to vector<4x16xf32>
    %210 = arith.addf %209, %208 : vector<4x16xf32>
    %211 = arith.divf %209, %210 : vector<4x16xf32>
    %212 = vector.extract_strided_slice %195 {offsets = [0, 32], sizes = [4, 16], strides = [1, 1]} : vector<4x64xf32> to vector<4x16xf32>
    %213 = math.tanh %212 : vector<4x16xf32>
    %214 = vector.extract_strided_slice %195 {offsets = [0, 48], sizes = [4, 16], strides = [1, 1]} : vector<4x64xf32> to vector<4x16xf32>
    %215 = arith.negf %214 : vector<4x16xf32>
    %216 = math.exp %215 : vector<4x16xf32>
    %cst_33 = arith.constant 1.000000e+00 : f32
    %217 = vector.broadcast %cst_33 : f32 to vector<4x16xf32>
    %218 = arith.addf %217, %216 : vector<4x16xf32>
    %219 = arith.divf %217, %218 : vector<4x16xf32>
    %220 = arith.mulf %211, %162 : vector<4x16xf32>
    %221 = arith.mulf %205, %213 : vector<4x16xf32>
    %222 = arith.addf %220, %221 : vector<4x16xf32>
    %223 = math.tanh %222 : vector<4x16xf32>
    %224 = arith.mulf %219, %223 : vector<4x16xf32>
    %225 = vector.extract_strided_slice %199 {offsets = [0, 0], sizes = [4, 16], strides = [1, 1]} : vector<4x64xf32> to vector<4x16xf32>
    %226 = arith.negf %225 : vector<4x16xf32>
    %227 = math.exp %226 : vector<4x16xf32>
    %cst_34 = arith.constant 1.000000e+00 : f32
    %228 = vector.broadcast %cst_34 : f32 to vector<4x16xf32>
    %229 = arith.addf %228, %227 : vector<4x16xf32>
    %230 = arith.divf %228, %229 : vector<4x16xf32>
    %231 = vector.extract_strided_slice %199 {offsets = [0, 16], sizes = [4, 16], strides = [1, 1]} : vector<4x64xf32> to vector<4x16xf32>
    %232 = arith.negf %231 : vector<4x16xf32>
    %233 = math.exp %232 : vector<4x16xf32>
    %cst_35 = arith.constant 1.000000e+00 : f32
    %234 = vector.broadcast %cst_35 : f32 to vector<4x16xf32>
    %235 = arith.addf %234, %233 : vector<4x16xf32>
    %236 = arith.divf %234, %235 : vector<4x16xf32>
    %237 = vector.extract_strided_slice %199 {offsets = [0, 32], sizes = [4, 16], strides = [1, 1]} : vector<4x64xf32> to vector<4x16xf32>
    %238 = math.tanh %237 : vector<4x16xf32>
    %239 = vector.extract_strided_slice %199 {offsets = [0, 48], sizes = [4, 16], strides = [1, 1]} : vector<4x64xf32> to vector<4x16xf32>
    %240 = arith.negf %239 : vector<4x16xf32>
    %241 = math.exp %240 : vector<4x16xf32>
    %cst_36 = arith.constant 1.000000e+00 : f32
    %242 = vector.broadcast %cst_36 : f32 to vector<4x16xf32>
    %243 = arith.addf %242, %241 : vector<4x16xf32>
    %244 = arith.divf %242, %243 : vector<4x16xf32>
    %245 = arith.mulf %236, %187 : vector<4x16xf32>
    %246 = arith.mulf %230, %238 : vector<4x16xf32>
    %247 = arith.addf %245, %246 : vector<4x16xf32>
    %248 = math.tanh %247 : vector<4x16xf32>
    %249 = arith.mulf %244, %248 : vector<4x16xf32>
    %250 = tpu.concatenate %224, %249 in 1 : vector<4x16xf32>, vector<4x16xf32> -> vector<4x32xf32>
    %cst_37 = arith.constant dense<0.000000e+00> : vector<4x128xf32>
    %251 = tpu.matmul %250, %0, %cst_37 {dimension_numbers = #tpu.dot_dimension_numbers<[1], [0], [0], [1], [0, 0, 1, 1], [], []>} : vector<4x32xf32>, vector<32x128xf32>, vector<4x128xf32> -> vector<4x128xf32>
    %252 = vector.extract_strided_slice %8 {offsets = [4, 0, 0], sizes = [1, 4, 64], strides = [1, 1, 1]} : vector<8x4x128xf32> to vector<1x4x64xf32>
    %253 = vector.shape_cast %252 : vector<1x4x64xf32> to vector<4x64xf32>
    %254 = vector.extract_strided_slice %251 {offsets = [0, 0], sizes = [4, 64], strides = [1, 1]} : vector<4x128xf32> to vector<4x64xf32>
    %255 = arith.addf %253, %254 : vector<4x64xf32>
    %256 = vector.extract_strided_slice %8 {offsets = [3, 0, 64], sizes = [1, 4, 64], strides = [1, 1, 1]} : vector<8x4x128xf32> to vector<1x4x64xf32>
    %257 = vector.shape_cast %256 : vector<1x4x64xf32> to vector<4x64xf32>
    %258 = vector.extract_strided_slice %251 {offsets = [0, 64], sizes = [4, 64], strides = [1, 1]} : vector<4x128xf32> to vector<4x64xf32>
    %259 = arith.addf %257, %258 : vector<4x64xf32>
    %260 = vector.extract_strided_slice %255 {offsets = [0, 0], sizes = [4, 16], strides = [1, 1]} : vector<4x64xf32> to vector<4x16xf32>
    %261 = arith.negf %260 : vector<4x16xf32>
    %262 = math.exp %261 : vector<4x16xf32>
    %cst_38 = arith.constant 1.000000e+00 : f32
    %263 = vector.broadcast %cst_38 : f32 to vector<4x16xf32>
    %264 = arith.addf %263, %262 : vector<4x16xf32>
    %265 = arith.divf %263, %264 : vector<4x16xf32>
    %266 = vector.extract_strided_slice %255 {offsets = [0, 16], sizes = [4, 16], strides = [1, 1]} : vector<4x64xf32> to vector<4x16xf32>
    %267 = arith.negf %266 : vector<4x16xf32>
    %268 = math.exp %267 : vector<4x16xf32>
    %cst_39 = arith.constant 1.000000e+00 : f32
    %269 = vector.broadcast %cst_39 : f32 to vector<4x16xf32>
    %270 = arith.addf %269, %268 : vector<4x16xf32>
    %271 = arith.divf %269, %270 : vector<4x16xf32>
    %272 = vector.extract_strided_slice %255 {offsets = [0, 32], sizes = [4, 16], strides = [1, 1]} : vector<4x64xf32> to vector<4x16xf32>
    %273 = math.tanh %272 : vector<4x16xf32>
    %274 = vector.extract_strided_slice %255 {offsets = [0, 48], sizes = [4, 16], strides = [1, 1]} : vector<4x64xf32> to vector<4x16xf32>
    %275 = arith.negf %274 : vector<4x16xf32>
    %276 = math.exp %275 : vector<4x16xf32>
    %cst_40 = arith.constant 1.000000e+00 : f32
    %277 = vector.broadcast %cst_40 : f32 to vector<4x16xf32>
    %278 = arith.addf %277, %276 : vector<4x16xf32>
    %279 = arith.divf %277, %278 : vector<4x16xf32>
    %280 = arith.mulf %271, %222 : vector<4x16xf32>
    %281 = arith.mulf %265, %273 : vector<4x16xf32>
    %282 = arith.addf %280, %281 : vector<4x16xf32>
    %283 = math.tanh %282 : vector<4x16xf32>
    %284 = arith.mulf %279, %283 : vector<4x16xf32>
    %285 = vector.extract_strided_slice %259 {offsets = [0, 0], sizes = [4, 16], strides = [1, 1]} : vector<4x64xf32> to vector<4x16xf32>
    %286 = arith.negf %285 : vector<4x16xf32>
    %287 = math.exp %286 : vector<4x16xf32>
    %cst_41 = arith.constant 1.000000e+00 : f32
    %288 = vector.broadcast %cst_41 : f32 to vector<4x16xf32>
    %289 = arith.addf %288, %287 : vector<4x16xf32>
    %290 = arith.divf %288, %289 : vector<4x16xf32>
    %291 = vector.extract_strided_slice %259 {offsets = [0, 16], sizes = [4, 16], strides = [1, 1]} : vector<4x64xf32> to vector<4x16xf32>
    %292 = arith.negf %291 : vector<4x16xf32>
    %293 = math.exp %292 : vector<4x16xf32>
    %cst_42 = arith.constant 1.000000e+00 : f32
    %294 = vector.broadcast %cst_42 : f32 to vector<4x16xf32>
    %295 = arith.addf %294, %293 : vector<4x16xf32>
    %296 = arith.divf %294, %295 : vector<4x16xf32>
    %297 = vector.extract_strided_slice %259 {offsets = [0, 32], sizes = [4, 16], strides = [1, 1]} : vector<4x64xf32> to vector<4x16xf32>
    %298 = math.tanh %297 : vector<4x16xf32>
    %299 = vector.extract_strided_slice %259 {offsets = [0, 48], sizes = [4, 16], strides = [1, 1]} : vector<4x64xf32> to vector<4x16xf32>
    %300 = arith.negf %299 : vector<4x16xf32>
    %301 = math.exp %300 : vector<4x16xf32>
    %cst_43 = arith.constant 1.000000e+00 : f32
    %302 = vector.broadcast %cst_43 : f32 to vector<4x16xf32>
    %303 = arith.addf %302, %301 : vector<4x16xf32>
    %304 = arith.divf %302, %303 : vector<4x16xf32>
    %305 = arith.mulf %296, %247 : vector<4x16xf32>
    %306 = arith.mulf %290, %298 : vector<4x16xf32>
    %307 = arith.addf %305, %306 : vector<4x16xf32>
    %308 = math.tanh %307 : vector<4x16xf32>
    %309 = arith.mulf %304, %308 : vector<4x16xf32>
    %310 = tpu.concatenate %284, %309 in 1 : vector<4x16xf32>, vector<4x16xf32> -> vector<4x32xf32>
    %cst_44 = arith.constant dense<0.000000e+00> : vector<4x128xf32>
    %311 = tpu.matmul %310, %0, %cst_44 {dimension_numbers = #tpu.dot_dimension_numbers<[1], [0], [0], [1], [0, 0, 1, 1], [], []>} : vector<4x32xf32>, vector<32x128xf32>, vector<4x128xf32> -> vector<4x128xf32>
    %312 = vector.extract_strided_slice %8 {offsets = [5, 0, 0], sizes = [1, 4, 64], strides = [1, 1, 1]} : vector<8x4x128xf32> to vector<1x4x64xf32>
    %313 = vector.shape_cast %312 : vector<1x4x64xf32> to vector<4x64xf32>
    %314 = vector.extract_strided_slice %311 {offsets = [0, 0], sizes = [4, 64], strides = [1, 1]} : vector<4x128xf32> to vector<4x64xf32>
    %315 = arith.addf %313, %314 : vector<4x64xf32>
    %316 = vector.extract_strided_slice %8 {offsets = [2, 0, 64], sizes = [1, 4, 64], strides = [1, 1, 1]} : vector<8x4x128xf32> to vector<1x4x64xf32>
    %317 = vector.shape_cast %316 : vector<1x4x64xf32> to vector<4x64xf32>
    %318 = vector.extract_strided_slice %311 {offsets = [0, 64], sizes = [4, 64], strides = [1, 1]} : vector<4x128xf32> to vector<4x64xf32>
    %319 = arith.addf %317, %318 : vector<4x64xf32>
    %320 = vector.extract_strided_slice %315 {offsets = [0, 0], sizes = [4, 16], strides = [1, 1]} : vector<4x64xf32> to vector<4x16xf32>
    %321 = arith.negf %320 : vector<4x16xf32>
    %322 = math.exp %321 : vector<4x16xf32>
    %cst_45 = arith.constant 1.000000e+00 : f32
    %323 = vector.broadcast %cst_45 : f32 to vector<4x16xf32>
    %324 = arith.addf %323, %322 : vector<4x16xf32>
    %325 = arith.divf %323, %324 : vector<4x16xf32>
    %326 = vector.extract_strided_slice %315 {offsets = [0, 16], sizes = [4, 16], strides = [1, 1]} : vector<4x64xf32> to vector<4x16xf32>
    %327 = arith.negf %326 : vector<4x16xf32>
    %328 = math.exp %327 : vector<4x16xf32>
    %cst_46 = arith.constant 1.000000e+00 : f32
    %329 = vector.broadcast %cst_46 : f32 to vector<4x16xf32>
    %330 = arith.addf %329, %328 : vector<4x16xf32>
    %331 = arith.divf %329, %330 : vector<4x16xf32>
    %332 = vector.extract_strided_slice %315 {offsets = [0, 32], sizes = [4, 16], strides = [1, 1]} : vector<4x64xf32> to vector<4x16xf32>
    %333 = math.tanh %332 : vector<4x16xf32>
    %334 = vector.extract_strided_slice %315 {offsets = [0, 48], sizes = [4, 16], strides = [1, 1]} : vector<4x64xf32> to vector<4x16xf32>
    %335 = arith.negf %334 : vector<4x16xf32>
    %336 = math.exp %335 : vector<4x16xf32>
    %cst_47 = arith.constant 1.000000e+00 : f32
    %337 = vector.broadcast %cst_47 : f32 to vector<4x16xf32>
    %338 = arith.addf %337, %336 : vector<4x16xf32>
    %339 = arith.divf %337, %338 : vector<4x16xf32>
    %340 = arith.mulf %331, %282 : vector<4x16xf32>
    %341 = arith.mulf %325, %333 : vector<4x16xf32>
    %342 = arith.addf %340, %341 : vector<4x16xf32>
    %343 = math.tanh %342 : vector<4x16xf32>
    %344 = arith.mulf %339, %343 : vector<4x16xf32>
    %345 = vector.extract_strided_slice %319 {offsets = [0, 0], sizes = [4, 16], strides = [1, 1]} : vector<4x64xf32> to vector<4x16xf32>
    %346 = arith.negf %345 : vector<4x16xf32>
    %347 = math.exp %346 : vector<4x16xf32>
    %cst_48 = arith.constant 1.000000e+00 : f32
    %348 = vector.broadcast %cst_48 : f32 to vector<4x16xf32>
    %349 = arith.addf %348, %347 : vector<4x16xf32>
    %350 = arith.divf %348, %349 : vector<4x16xf32>
    %351 = vector.extract_strided_slice %319 {offsets = [0, 16], sizes = [4, 16], strides = [1, 1]} : vector<4x64xf32> to vector<4x16xf32>
    %352 = arith.negf %351 : vector<4x16xf32>
    %353 = math.exp %352 : vector<4x16xf32>
    %cst_49 = arith.constant 1.000000e+00 : f32
    %354 = vector.broadcast %cst_49 : f32 to vector<4x16xf32>
    %355 = arith.addf %354, %353 : vector<4x16xf32>
    %356 = arith.divf %354, %355 : vector<4x16xf32>
    %357 = vector.extract_strided_slice %319 {offsets = [0, 32], sizes = [4, 16], strides = [1, 1]} : vector<4x64xf32> to vector<4x16xf32>
    %358 = math.tanh %357 : vector<4x16xf32>
    %359 = vector.extract_strided_slice %319 {offsets = [0, 48], sizes = [4, 16], strides = [1, 1]} : vector<4x64xf32> to vector<4x16xf32>
    %360 = arith.negf %359 : vector<4x16xf32>
    %361 = math.exp %360 : vector<4x16xf32>
    %cst_50 = arith.constant 1.000000e+00 : f32
    %362 = vector.broadcast %cst_50 : f32 to vector<4x16xf32>
    %363 = arith.addf %362, %361 : vector<4x16xf32>
    %364 = arith.divf %362, %363 : vector<4x16xf32>
    %365 = arith.mulf %356, %307 : vector<4x16xf32>
    %366 = arith.mulf %350, %358 : vector<4x16xf32>
    %367 = arith.addf %365, %366 : vector<4x16xf32>
    %368 = math.tanh %367 : vector<4x16xf32>
    %369 = arith.mulf %364, %368 : vector<4x16xf32>
    %370 = tpu.concatenate %344, %369 in 1 : vector<4x16xf32>, vector<4x16xf32> -> vector<4x32xf32>
    %cst_51 = arith.constant dense<0.000000e+00> : vector<4x128xf32>
    %371 = tpu.matmul %370, %0, %cst_51 {dimension_numbers = #tpu.dot_dimension_numbers<[1], [0], [0], [1], [0, 0, 1, 1], [], []>} : vector<4x32xf32>, vector<32x128xf32>, vector<4x128xf32> -> vector<4x128xf32>
    %372 = vector.extract_strided_slice %8 {offsets = [6, 0, 0], sizes = [1, 4, 64], strides = [1, 1, 1]} : vector<8x4x128xf32> to vector<1x4x64xf32>
    %373 = vector.shape_cast %372 : vector<1x4x64xf32> to vector<4x64xf32>
    %374 = vector.extract_strided_slice %371 {offsets = [0, 0], sizes = [4, 64], strides = [1, 1]} : vector<4x128xf32> to vector<4x64xf32>
    %375 = arith.addf %373, %374 : vector<4x64xf32>
    %376 = vector.extract_strided_slice %8 {offsets = [1, 0, 64], sizes = [1, 4, 64], strides = [1, 1, 1]} : vector<8x4x128xf32> to vector<1x4x64xf32>
    %377 = vector.shape_cast %376 : vector<1x4x64xf32> to vector<4x64xf32>
    %378 = vector.extract_strided_slice %371 {offsets = [0, 64], sizes = [4, 64], strides = [1, 1]} : vector<4x128xf32> to vector<4x64xf32>
    %379 = arith.addf %377, %378 : vector<4x64xf32>
    %380 = vector.extract_strided_slice %375 {offsets = [0, 0], sizes = [4, 16], strides = [1, 1]} : vector<4x64xf32> to vector<4x16xf32>
    %381 = arith.negf %380 : vector<4x16xf32>
    %382 = math.exp %381 : vector<4x16xf32>
    %cst_52 = arith.constant 1.000000e+00 : f32
    %383 = vector.broadcast %cst_52 : f32 to vector<4x16xf32>
    %384 = arith.addf %383, %382 : vector<4x16xf32>
    %385 = arith.divf %383, %384 : vector<4x16xf32>
    %386 = vector.extract_strided_slice %375 {offsets = [0, 16], sizes = [4, 16], strides = [1, 1]} : vector<4x64xf32> to vector<4x16xf32>
    %387 = arith.negf %386 : vector<4x16xf32>
    %388 = math.exp %387 : vector<4x16xf32>
    %cst_53 = arith.constant 1.000000e+00 : f32
    %389 = vector.broadcast %cst_53 : f32 to vector<4x16xf32>
    %390 = arith.addf %389, %388 : vector<4x16xf32>
    %391 = arith.divf %389, %390 : vector<4x16xf32>
    %392 = vector.extract_strided_slice %375 {offsets = [0, 32], sizes = [4, 16], strides = [1, 1]} : vector<4x64xf32> to vector<4x16xf32>
    %393 = math.tanh %392 : vector<4x16xf32>
    %394 = vector.extract_strided_slice %375 {offsets = [0, 48], sizes = [4, 16], strides = [1, 1]} : vector<4x64xf32> to vector<4x16xf32>
    %395 = arith.negf %394 : vector<4x16xf32>
    %396 = math.exp %395 : vector<4x16xf32>
    %cst_54 = arith.constant 1.000000e+00 : f32
    %397 = vector.broadcast %cst_54 : f32 to vector<4x16xf32>
    %398 = arith.addf %397, %396 : vector<4x16xf32>
    %399 = arith.divf %397, %398 : vector<4x16xf32>
    %400 = arith.mulf %391, %342 : vector<4x16xf32>
    %401 = arith.mulf %385, %393 : vector<4x16xf32>
    %402 = arith.addf %400, %401 : vector<4x16xf32>
    %403 = math.tanh %402 : vector<4x16xf32>
    %404 = arith.mulf %399, %403 : vector<4x16xf32>
    %405 = vector.extract_strided_slice %379 {offsets = [0, 0], sizes = [4, 16], strides = [1, 1]} : vector<4x64xf32> to vector<4x16xf32>
    %406 = arith.negf %405 : vector<4x16xf32>
    %407 = math.exp %406 : vector<4x16xf32>
    %cst_55 = arith.constant 1.000000e+00 : f32
    %408 = vector.broadcast %cst_55 : f32 to vector<4x16xf32>
    %409 = arith.addf %408, %407 : vector<4x16xf32>
    %410 = arith.divf %408, %409 : vector<4x16xf32>
    %411 = vector.extract_strided_slice %379 {offsets = [0, 16], sizes = [4, 16], strides = [1, 1]} : vector<4x64xf32> to vector<4x16xf32>
    %412 = arith.negf %411 : vector<4x16xf32>
    %413 = math.exp %412 : vector<4x16xf32>
    %cst_56 = arith.constant 1.000000e+00 : f32
    %414 = vector.broadcast %cst_56 : f32 to vector<4x16xf32>
    %415 = arith.addf %414, %413 : vector<4x16xf32>
    %416 = arith.divf %414, %415 : vector<4x16xf32>
    %417 = vector.extract_strided_slice %379 {offsets = [0, 32], sizes = [4, 16], strides = [1, 1]} : vector<4x64xf32> to vector<4x16xf32>
    %418 = math.tanh %417 : vector<4x16xf32>
    %419 = vector.extract_strided_slice %379 {offsets = [0, 48], sizes = [4, 16], strides = [1, 1]} : vector<4x64xf32> to vector<4x16xf32>
    %420 = arith.negf %419 : vector<4x16xf32>
    %421 = math.exp %420 : vector<4x16xf32>
    %cst_57 = arith.constant 1.000000e+00 : f32
    %422 = vector.broadcast %cst_57 : f32 to vector<4x16xf32>
    %423 = arith.addf %422, %421 : vector<4x16xf32>
    %424 = arith.divf %422, %423 : vector<4x16xf32>
    %425 = arith.mulf %416, %367 : vector<4x16xf32>
    %426 = arith.mulf %410, %418 : vector<4x16xf32>
    %427 = arith.addf %425, %426 : vector<4x16xf32>
    %428 = math.tanh %427 : vector<4x16xf32>
    %429 = arith.mulf %424, %428 : vector<4x16xf32>
    %430 = tpu.concatenate %404, %429 in 1 : vector<4x16xf32>, vector<4x16xf32> -> vector<4x32xf32>
    %cst_58 = arith.constant dense<0.000000e+00> : vector<4x128xf32>
    %431 = tpu.matmul %430, %0, %cst_58 {dimension_numbers = #tpu.dot_dimension_numbers<[1], [0], [0], [1], [0, 0, 1, 1], [], []>} : vector<4x32xf32>, vector<32x128xf32>, vector<4x128xf32> -> vector<4x128xf32>
    %432 = vector.extract_strided_slice %8 {offsets = [7, 0, 0], sizes = [1, 4, 64], strides = [1, 1, 1]} : vector<8x4x128xf32> to vector<1x4x64xf32>
    %433 = vector.shape_cast %432 : vector<1x4x64xf32> to vector<4x64xf32>
    %434 = vector.extract_strided_slice %431 {offsets = [0, 0], sizes = [4, 64], strides = [1, 1]} : vector<4x128xf32> to vector<4x64xf32>
    %435 = arith.addf %433, %434 : vector<4x64xf32>
    %436 = vector.extract_strided_slice %8 {offsets = [0, 0, 64], sizes = [1, 4, 64], strides = [1, 1, 1]} : vector<8x4x128xf32> to vector<1x4x64xf32>
    %437 = vector.shape_cast %436 : vector<1x4x64xf32> to vector<4x64xf32>
    %438 = vector.extract_strided_slice %431 {offsets = [0, 64], sizes = [4, 64], strides = [1, 1]} : vector<4x128xf32> to vector<4x64xf32>
    %439 = arith.addf %437, %438 : vector<4x64xf32>
    %440 = vector.extract_strided_slice %435 {offsets = [0, 0], sizes = [4, 16], strides = [1, 1]} : vector<4x64xf32> to vector<4x16xf32>
    %441 = arith.negf %440 : vector<4x16xf32>
    %442 = math.exp %441 : vector<4x16xf32>
    %cst_59 = arith.constant 1.000000e+00 : f32
    %443 = vector.broadcast %cst_59 : f32 to vector<4x16xf32>
    %444 = arith.addf %443, %442 : vector<4x16xf32>
    %445 = arith.divf %443, %444 : vector<4x16xf32>
    %446 = vector.extract_strided_slice %435 {offsets = [0, 16], sizes = [4, 16], strides = [1, 1]} : vector<4x64xf32> to vector<4x16xf32>
    %447 = arith.negf %446 : vector<4x16xf32>
    %448 = math.exp %447 : vector<4x16xf32>
    %cst_60 = arith.constant 1.000000e+00 : f32
    %449 = vector.broadcast %cst_60 : f32 to vector<4x16xf32>
    %450 = arith.addf %449, %448 : vector<4x16xf32>
    %451 = arith.divf %449, %450 : vector<4x16xf32>
    %452 = vector.extract_strided_slice %435 {offsets = [0, 32], sizes = [4, 16], strides = [1, 1]} : vector<4x64xf32> to vector<4x16xf32>
    %453 = math.tanh %452 : vector<4x16xf32>
    %454 = vector.extract_strided_slice %435 {offsets = [0, 48], sizes = [4, 16], strides = [1, 1]} : vector<4x64xf32> to vector<4x16xf32>
    %455 = arith.negf %454 : vector<4x16xf32>
    %456 = math.exp %455 : vector<4x16xf32>
    %cst_61 = arith.constant 1.000000e+00 : f32
    %457 = vector.broadcast %cst_61 : f32 to vector<4x16xf32>
    %458 = arith.addf %457, %456 : vector<4x16xf32>
    %459 = arith.divf %457, %458 : vector<4x16xf32>
    %460 = arith.mulf %451, %402 : vector<4x16xf32>
    %461 = arith.mulf %445, %453 : vector<4x16xf32>
    %462 = arith.addf %460, %461 : vector<4x16xf32>
    %463 = math.tanh %462 : vector<4x16xf32>
    %464 = arith.mulf %459, %463 : vector<4x16xf32>
    %465 = vector.extract_strided_slice %439 {offsets = [0, 0], sizes = [4, 16], strides = [1, 1]} : vector<4x64xf32> to vector<4x16xf32>
    %466 = arith.negf %465 : vector<4x16xf32>
    %467 = math.exp %466 : vector<4x16xf32>
    %cst_62 = arith.constant 1.000000e+00 : f32
    %468 = vector.broadcast %cst_62 : f32 to vector<4x16xf32>
    %469 = arith.addf %468, %467 : vector<4x16xf32>
    %470 = arith.divf %468, %469 : vector<4x16xf32>
    %471 = vector.extract_strided_slice %439 {offsets = [0, 16], sizes = [4, 16], strides = [1, 1]} : vector<4x64xf32> to vector<4x16xf32>
    %472 = arith.negf %471 : vector<4x16xf32>
    %473 = math.exp %472 : vector<4x16xf32>
    %cst_63 = arith.constant 1.000000e+00 : f32
    %474 = vector.broadcast %cst_63 : f32 to vector<4x16xf32>
    %475 = arith.addf %474, %473 : vector<4x16xf32>
    %476 = arith.divf %474, %475 : vector<4x16xf32>
    %477 = vector.extract_strided_slice %439 {offsets = [0, 32], sizes = [4, 16], strides = [1, 1]} : vector<4x64xf32> to vector<4x16xf32>
    %478 = math.tanh %477 : vector<4x16xf32>
    %479 = vector.extract_strided_slice %439 {offsets = [0, 48], sizes = [4, 16], strides = [1, 1]} : vector<4x64xf32> to vector<4x16xf32>
    %480 = arith.negf %479 : vector<4x16xf32>
    %481 = math.exp %480 : vector<4x16xf32>
    %cst_64 = arith.constant 1.000000e+00 : f32
    %482 = vector.broadcast %cst_64 : f32 to vector<4x16xf32>
    %483 = arith.addf %482, %481 : vector<4x16xf32>
    %484 = arith.divf %482, %483 : vector<4x16xf32>
    %485 = arith.mulf %476, %427 : vector<4x16xf32>
    %486 = arith.mulf %470, %478 : vector<4x16xf32>
    %487 = arith.addf %485, %486 : vector<4x16xf32>
    %488 = math.tanh %487 : vector<4x16xf32>
    %489 = arith.mulf %484, %488 : vector<4x16xf32>
    %490 = tpu.concatenate %44, %489 in 1 : vector<4x16xf32>, vector<4x16xf32> -> vector<4x32xf32>
    %491 = tpu.concatenate %104, %429 in 1 : vector<4x16xf32>, vector<4x16xf32> -> vector<4x32xf32>
    %492 = tpu.concatenate %164, %369 in 1 : vector<4x16xf32>, vector<4x16xf32> -> vector<4x32xf32>
    %493 = tpu.concatenate %224, %309 in 1 : vector<4x16xf32>, vector<4x16xf32> -> vector<4x32xf32>
    %494 = tpu.concatenate %284, %249 in 1 : vector<4x16xf32>, vector<4x16xf32> -> vector<4x32xf32>
    %495 = tpu.concatenate %344, %189 in 1 : vector<4x16xf32>, vector<4x16xf32> -> vector<4x32xf32>
    %496 = tpu.concatenate %404, %129 in 1 : vector<4x16xf32>, vector<4x16xf32> -> vector<4x32xf32>
    %497 = tpu.concatenate %464, %69 in 1 : vector<4x16xf32>, vector<4x16xf32> -> vector<4x32xf32>
    %498 = tpu.concatenate %490, %491, %492, %493, %494, %495, %496, %497 in 1 : vector<4x32xf32>, vector<4x32xf32>, vector<4x32xf32>, vector<4x32xf32>, vector<4x32xf32>, vector<4x32xf32>, vector<4x32xf32>, vector<4x32xf32> -> vector<4x256xf32>
    %c0_65 = arith.constant 0 : index
    %c0_66 = arith.constant 0 : index
    %499 = vector.load %arg2[%c0_65, %c0_66] : memref<4x256xf32, #tpu.memory_space<vmem>>, vector<4x256xf32>
    %500 = arith.mulf %498, %499 : vector<4x256xf32>
    %c0_67 = arith.constant 0 : index
    %c0_68 = arith.constant 0 : index
    %501 = vector.load %arg6[%c0_67, %c0_68] : memref<4x256xf32, #tpu.memory_space<vmem>>, vector<4x256xf32>
    tpu.vector_store %arg6[%c0_67, %c0_68], %500 {strides = array<i32>} : memref<4x256xf32, #tpu.memory_space<vmem>>, vector<4x256xf32>,
    return
  }
  func.func @transform_0(%arg0: i32) -> (i32, i32, i32) {
    %c0_i32 = arith.constant 0 : i32
    %c0_i32_0 = arith.constant 0 : i32
    %c0_i32_1 = arith.constant 0 : i32
    %c0_i32_2 = arith.constant 0 : i32
    return %c0_i32, %c0_i32_0, %c0_i32_1 : i32, i32, i32
  }
  func.func @transform_1(%arg0: i32) -> (i32, i32) {
    %c0_i32 = arith.constant 0 : i32
    %c0_i32_0 = arith.constant 0 : i32
    %c0_i32_1 = arith.constant 0 : i32
    return %c0_i32, %c0_i32_0 : i32, i32
  }
  func.func @transform_2(%arg0: i32) -> (i32, i32) {
    %c0_i32 = arith.constant 0 : i32
    %c0_i32_0 = arith.constant 0 : i32
    %c0_i32_1 = arith.constant 0 : i32
    return %c0_i32, %c0_i32_0 : i32, i32
  }
  func.func @transform_3(%arg0: i32) -> (i32, i32) {
    %c0_i32 = arith.constant 0 : i32
    %c0_i32_0 = arith.constant 0 : i32
    %c0_i32_1 = arith.constant 0 : i32
    return %c0_i32, %c0_i32_0 : i32, i32
  }
  func.func @transform_4(%arg0: i32) -> (i32, i32) {
    %c0_i32 = arith.constant 0 : i32
    %c0_i32_0 = arith.constant 0 : i32
    %c0_i32_1 = arith.constant 0 : i32
    return %c0_i32, %c0_i32_0 : i32, i32
  }
  func.func @transform_5(%arg0: i32) -> (i32, i32) {
    %c0_i32 = arith.constant 0 : i32
    %c0_i32_0 = arith.constant 0 : i32
    %c0_i32_1 = arith.constant 0 : i32
    return %c0_i32, %c0_i32_0 : i32, i32
  }
}

</mosaic_0001>

<llo_original>
// kernel: tpu_custom_call.1
$region0: #{tpu_custom_call.1}
  #allocation0 [shape = 'u32[]', space=smem, size = 0x4, offset = 0x4, fixed_abs, tag = 'smem constant byte address 0x4 - core index']
  #allocation1 [shape = 'u32[144,128]{1,0:T(1,128)}', space=vmem, size = 0x12000, scoped, tag = 'internal scratch']
  %s0 = inlined_call_operand.hbm [shape: f32[8,4,16], index: 0, kind: input, shape index: {}]
  %s1 = inlined_call_operand.hbm [shape: f32[4,256], index: 1, kind: input, shape index: {}]
  %s2 = inlined_call_operand.hbm [shape: f32[16,128], index: 2, kind: input, shape index: {}]
  %s3 = inlined_call_operand.hbm [shape: f32[32,128], index: 3, kind: input, shape index: {}]
  %s4 = inlined_call_operand.vmem [shape: f32[1,128], index: 4, kind: input, shape index: {}]
  %s5 = inlined_call_operand.hbm [shape: f32[4,256], index: 5, kind: output, shape index: {}]
  %s6 = sld [smem:[#allocation0]]
  $region46: #{tpu_custom_call.1} parent=0
    _
  %s8 = ssub.s32 1, %s6
  %s9 = scalar_select 0, %s8, %s6
  $region1: #{tpu_custom_call.1} parent=0
    #allocation2 [shape = 'u8[16384]{0}', space=vmem, size = 0x4000, scoped, tag = 'input window, operand 0, single buffered']
    #allocation3 [shape = 's32[1]{0}', space=sflag, size = 0x4, scoped, tag = 'scoped memory for tpu_custom_call.1']
    #allocation4 [shape = 's32[1]{0}', space=sflag, size = 0x4, scoped, tag = 'scoped memory for tpu_custom_call.1']
    #allocation5 [shape = 'u8[4096]{0}', space=vmem, size = 0x1000, scoped, tag = 'input window, operand 1, single buffered']
    #allocation6 [shape = 's32[1]{0}', space=sflag, size = 0x4, scoped, tag = 'scoped memory for tpu_custom_call.1']
    #allocation7 [shape = 'u8[8192]{0}', space=vmem, size = 0x2000, scoped, tag = 'input window, operand 2, single buffered']
    #allocation8 [shape = 'u8[16384]{0}', space=vmem, size = 0x4000, scoped, tag = 'input window, operand 3, single buffered']
    #allocation9 [shape = 's32[1]{0}', space=sflag, size = 0x4, scoped, tag = 'scoped memory for tpu_custom_call.1']
    #allocation10 [shape = 'u8[4096]{0}', space=vmem, size = 0x1000, scoped, tag = 'output window, operand 0, single buffered']
    %10 = vsyncpa [#allocation3], 0
    %11 = vsyncpa [#allocation6], 0
    %12 = vsyncpa [#allocation9], 0
    %13 = vsyncpa [#allocation4], 0
    // Predicated region
    $region2: #{tpu_custom_call.1} parent=1 // pred_check
      _
    $region3: #{tpu_custom_call.1} parent=1 // pred_check_branch
      %15 = sbr.rel (0) target = $region5
    $region4: #{tpu_custom_call.1} parent=1 // pred_region
      %s17 = ssub.s32 512, 512
      %18 = vsyncadd [#allocation3], %s17
      %s19 = sshll.u32 [#allocation2], 4
      %s20 = int_to_ptr.vmem [resolvable:$true] %s19
      %25 = dma.hbm_to_vmem [thread:$0]  %s0, 512, %s20, [#allocation3], 64, 64, 4
    $region5: #{tpu_custom_call.1} parent=1 // pred_fallthru
      _
    // Predicated region
    $region6: #{tpu_custom_call.1} parent=1 // pred_check
      _
    $region7: #{tpu_custom_call.1} parent=1 // pred_check_branch
      %27 = sbr.rel (0) target = $region9
    $region8: #{tpu_custom_call.1} parent=1 // pred_region
      %s29 = ssub.s32 128, 128
      %30 = vsyncadd [#allocation6], %s29
      %s32 = sshll.u32 [#allocation5], 4
      %s33 = int_to_ptr.vmem [resolvable:$true] %s32
      %35 = dma.hbm_to_vmem [thread:$0]  %s1, 128, %s33, [#allocation6]
    $region9: #{tpu_custom_call.1} parent=1 // pred_fallthru
      _
    // Predicated region
    $region10: #{tpu_custom_call.1} parent=1 // pred_check
      _
    $region11: #{tpu_custom_call.1} parent=1 // pred_check_branch
      %37 = sbr.rel (0) target = $region13
    $region12: #{tpu_custom_call.1} parent=1 // pred_region
      %s39 = ssub.s32 256, 256
      %40 = vsyncadd [#allocation6], %s39
      %s41 = sshll.u32 [#allocation7], 4
      %s42 = int_to_ptr.vmem [resolvable:$true] %s41
      %47 = dma.hbm_to_vmem [thread:$0]  %s2, 256, %s42, [#allocation6], 128, 128, 8
    $region13: #{tpu_custom_call.1} parent=1 // pred_fallthru
      _
    // Predicated region
    $region14: #{tpu_custom_call.1} parent=1 // pred_check
      _
    $region15: #{tpu_custom_call.1} parent=1 // pred_check_branch
      %49 = sbr.rel (0) target = $region17
    $region16: #{tpu_custom_call.1} parent=1 // pred_region
      %s51 = ssub.s32 512, 512
      %52 = vsyncadd [#allocation9], %s51
      %s53 = sshll.u32 [#allocation8], 4
      %s54 = int_to_ptr.vmem [resolvable:$true] %s53
      %59 = dma.hbm_to_vmem [thread:$0]  %s3, 512, %s54, [#allocation9], 128, 128, 8
    $region17: #{tpu_custom_call.1} parent=1 // pred_fallthru
      _
    // Predicated region
    $region18: #{tpu_custom_call.1} parent=1 // pred_check
      _
    $region19: #{tpu_custom_call.1} parent=1 // pred_check_branch
      %61 = sbr.rel (0) target = $region21
    $region20: #{tpu_custom_call.1} parent=1 // pred_region
      _
    $region21: #{tpu_custom_call.1} parent=1 // pred_fallthru
      _
    // Predicated region
    $region22: #{tpu_custom_call.1} parent=1 // pred_check
      _
    $region23: #{tpu_custom_call.1} parent=1 // pred_check_branch
      %63 = sbr.rel (0) target = $region25
    $region24: #{tpu_custom_call.1} parent=1 // pred_region
      %64 = dma.done [#allocation3], 512
    $region25: #{tpu_custom_call.1} parent=1 // pred_fallthru
      _
    // Predicated region
    $region26: #{tpu_custom_call.1} parent=1 // pred_check
      _
    $region27: #{tpu_custom_call.1} parent=1 // pred_check_branch
      %66 = sbr.rel (0) target = $region29
    $region28: #{tpu_custom_call.1} parent=1 // pred_region
      %67 = dma.done [#allocation6], 128
    $region29: #{tpu_custom_call.1} parent=1 // pred_fallthru
      _
    // Predicated region
    $region30: #{tpu_custom_call.1} parent=1 // pred_check
      _
    $region31: #{tpu_custom_call.1} parent=1 // pred_check_branch
      %69 = sbr.rel (0) target = $region33
    $region32: #{tpu_custom_call.1} parent=1 // pred_region
      %70 = dma.done [#allocation6], 256
    $region33: #{tpu_custom_call.1} parent=1 // pred_fallthru
      _
    // Predicated region
    $region34: #{tpu_custom_call.1} parent=1 // pred_check
      _
    $region35: #{tpu_custom_call.1} parent=1 // pred_check_branch
      %72 = sbr.rel (0) target = $region37
    $region36: #{tpu_custom_call.1} parent=1 // pred_region
      %73 = dma.done [#allocation9], 512
    $region37: #{tpu_custom_call.1} parent=1 // pred_fallthru
      _
    %v74 = vld [vmem:[#allocation8] sm:$0xff]
    %v75 = vld [vmem:[#allocation8 + $0x8] sm:$0xff]
    %v76 = vld [vmem:[#allocation8 + $0x10] sm:$0xff]
    %v77 = vld [vmem:[#allocation8 + $0x18] sm:$0xff]
    %v78 = vld [vmem:[#allocation2] sm:$0xf]
    %v79 = vld [vmem:[#allocation2 + $0x4] sm:$0xf]
    %v80 = vld [vmem:[#allocation2 + $0x8] sm:$0xf]
    %v81 = vld [vmem:[#allocation2 + $0xc] sm:$0xf]
    %v82 = vld [vmem:[#allocation2 + $0x10] sm:$0xf]
    %v83 = vld [vmem:[#allocation2 + $0x14] sm:$0xf]
    %v84 = vld [vmem:[#allocation2 + $0x18] sm:$0xf]
    %v85 = vld [vmem:[#allocation2 + $0x1c] sm:$0xf]
    %v86 = vld [vmem:[#allocation7] sm:$0xff]
    %v87 = vld [vmem:[#allocation7 + $0x8] sm:$0xff]
    %v88 = vld [vmem:[%s4] sm:$0x1]
    %v90 = vlaneseq
    %v91 = vshrl.u32 %v90, 7
    %v92 = vsub.s32 0, %v91
    %v93 = vrot.slane %v88, %v92
    %v103 = vcombine.low %v78, %v79
    %v104 = vcombine.low %v80, %v81
    %v105 = vcombine.low %v82, %v83
    %v106 = vcombine.low %v84, %v85
    %vm107 = vcmask 130048
    %v108 = vsel %vm107, %v103, 0
    %v110 = vsel %vm107, %v104, 0
    %v112 = vsel %vm107, %v105, 0
    %v114 = vsel %vm107, %v106, 0
    %116 = vmatprep.subr.mxu0 0.0
    %117 = vmatpush1.msra.mxu0 0.0
    %118 = vmatprep.subr.mxu0 0.0
    %119 = vmatpush1.msra.mxu0 0.0
    %120 = vmatprep.subr.mxu0 0.0
    %121 = vmatpush1.msra.mxu0 0.0
    %122 = vmatprep.subr.mxu0 0.0
    %123 = vmatpush1.msra.mxu0 0.0
    %124 = vmatprep.subr.mxu0 0.0
    %125 = vmatpush1.msra.mxu0 0.0
    %126 = vmatprep.subr.mxu0 0.0
    %127 = vmatpush1.msra.mxu0 0.0
    %128 = vmatprep.subr.mxu0 0.0
    %129 = vmatpush1.msra.mxu0 0.0
    %130 = vmatprep.subr.mxu0 0.0
    %131 = vmatpush1.msra.mxu0 0.0
    %132 = vmatprep.subr.mxu0 0.0
    %133 = vmatpush1.msra.mxu0 0.0
    %134 = vmatprep.subr.mxu0 0.0
    %135 = vmatpush1.msra.mxu0 0.0
    %136 = vmatprep.subr.mxu0 0.0
    %137 = vmatpush1.msra.mxu0 0.0
    %138 = vmatprep.subr.mxu0 0.0
    %139 = vmatpush1.msra.mxu0 0.0
    %140 = vmatprep.subr.mxu0 0.0
    %141 = vmatpush1.msra.mxu0 0.0
    %142 = vmatprep.subr.mxu0 0.0
    %143 = vmatpush1.msra.mxu0 0.0
    %144 = vmatprep.subr.mxu0 0.0
    %145 = vmatpush1.msra.mxu0 %v87
    %146 = vmatprep.subr.mxu0 0.0
    %147 = vmatpush1.msra.mxu0 %v86
    %148 = vmatprep.subr.mxu0 0.0
    %149 = vmatpush2.msra.mxu0 0.0
    %150 = vmatprep.subr.mxu0 0.0
    %151 = vmatpush2.msra.mxu0 0.0
    %152 = vmatprep.subr.mxu0 0.0
    %153 = vmatpush2.msra.mxu0 0.0
    %154 = vmatprep.subr.mxu0 0.0
    %155 = vmatpush2.msra.mxu0 0.0
    %156 = vmatprep.subr.mxu0 0.0
    %157 = vmatpush2.msra.mxu0 0.0
    %158 = vmatprep.subr.mxu0 0.0
    %159 = vmatpush2.msra.mxu0 0.0
    %160 = vmatprep.subr.mxu0 0.0
    %161 = vmatpush2.msra.mxu0 0.0
    %162 = vmatprep.subr.mxu0 0.0
    %163 = vmatpush2.msra.mxu0 0.0
    %164 = vmatprep.subr.mxu0 0.0
    %165 = vmatpush2.msra.mxu0 0.0
    %166 = vmatprep.subr.mxu0 0.0
    %167 = vmatpush2.msra.mxu0 0.0
    %168 = vmatprep.subr.mxu0 0.0
    %169 = vmatpush2.msra.mxu0 0.0
    %170 = vmatprep.subr.mxu0 0.0
    %171 = vmatpush2.msra.mxu0 0.0
    %172 = vmatprep.subr.mxu0 0.0
    %173 = vmatpush2.msra.mxu0 0.0
    %174 = vmatprep.subr.mxu0 0.0
    %175 = vmatpush2.msra.mxu0 0.0
    %176 = vmatprep.subr.mxu0 0.0
    %177 = vmatpush2.msra.mxu0 0.0
    %178 = vmatprep.subr.mxu0 0.0
    %179 = vmatpush2.msra.mxu0 0.0
    %180 = vmatprep.mubr.f32.mxu0 0.0
    %181 = vmatmul.mubr.f32.gmra.mxu0 %v108
    %v182 = vpop.f32.mrf.mxu0
    %v183 = vadd.f32 %v93, %v182
    %v184 = vpop.f32.mrf.mxu0
    %185 = vmatprep.mubr.f32.mxu0 0.0
    %186 = vmatmul.mubr.f32.gmra.mxu0 %v110
    %v187 = vpop.f32.mrf.mxu0
    %v188 = vadd.f32 %v93, %v187
    %v189 = vpop.f32.mrf.mxu0
    %190 = vmatprep.mubr.f32.mxu0 0.0
    %191 = vmatmul.mubr.f32.gmra.mxu0 %v112
    %v192 = vpop.f32.mrf.mxu0
    %v193 = vadd.f32 %v93, %v192
    %v194 = vpop.f32.mrf.mxu0
    %195 = vmatprep.mubr.f32.mxu0 0.0
    %196 = vmatmul.mubr.f32.gmra.mxu0 %v114
    %v197 = vpop.f32.mrf.mxu0
    %v198 = vadd.f32 %v93, %v197
    %v199 = vpop.f32.mrf.mxu0
    %200 = vdwg.mxu0
    %v205 = vcombine.high %v183, %v183
    %v206 = vcombine.high %v188, %v188
    %v207 = vcombine.high %v193, %v193
    %v208 = vcombine.high %v198, %v198
    %vm213 = vcmask 261120
    %v215 = vsel %vm213, 0.0, 0
    %217 = vmatprep.subr.mxu0 0.0
    %218 = vmatpush1.msra.mxu0 0.0
    %219 = vmatprep.subr.mxu0 0.0
    %220 = vmatpush1.msra.mxu0 0.0
    %221 = vmatprep.subr.mxu0 0.0
    %222 = vmatpush1.msra.mxu0 0.0
    %223 = vmatprep.subr.mxu0 0.0
    %224 = vmatpush1.msra.mxu0 0.0
    %225 = vmatprep.subr.mxu0 0.0
    %226 = vmatpush1.msra.mxu0 0.0
    %227 = vmatprep.subr.mxu0 0.0
    %228 = vmatpush1.msra.mxu0 0.0
    %229 = vmatprep.subr.mxu0 0.0
    %230 = vmatpush1.msra.mxu0 0.0
    %231 = vmatprep.subr.mxu0 0.0
    %232 = vmatpush1.msra.mxu0 0.0
    %233 = vmatprep.subr.mxu0 0.0
    %234 = vmatpush1.msra.mxu0 0.0
    %235 = vmatprep.subr.mxu0 0.0
    %236 = vmatpush1.msra.mxu0 0.0
    %237 = vmatprep.subr.mxu0 0.0
    %238 = vmatpush1.msra.mxu0 0.0
    %239 = vmatprep.subr.mxu0 0.0
    %240 = vmatpush1.msra.mxu0 0.0
    %241 = vmatprep.subr.mxu0 0.0
    %242 = vmatpush1.msra.mxu0 %v77
    %243 = vmatprep.subr.mxu0 0.0
    %244 = vmatpush1.msra.mxu0 %v76
    %245 = vmatprep.subr.mxu0 0.0
    %246 = vmatpush1.msra.mxu0 %v75
    %247 = vmatprep.subr.mxu0 0.0
    %248 = vmatpush1.msra.mxu0 %v74
    %249 = vmatprep.subr.mxu0 0.0
    %250 = vmatpush2.msra.mxu0 0.0
    %251 = vmatprep.subr.mxu0 0.0
    %252 = vmatpush2.msra.mxu0 0.0
    %253 = vmatprep.subr.mxu0 0.0
    %254 = vmatpush2.msra.mxu0 0.0
    %255 = vmatprep.subr.mxu0 0.0
    %256 = vmatpush2.msra.mxu0 0.0
    %257 = vmatprep.subr.mxu0 0.0
    %258 = vmatpush2.msra.mxu0 0.0
    %259 = vmatprep.subr.mxu0 0.0
    %260 = vmatpush2.msra.mxu0 0.0
    %261 = vmatprep.subr.mxu0 0.0
    %262 = vmatpush2.msra.mxu0 0.0
    %263 = vmatprep.subr.mxu0 0.0
    %264 = vmatpush2.msra.mxu0 0.0
    %265 = vmatprep.subr.mxu0 0.0
    %266 = vmatpush2.msra.mxu0 0.0
    %267 = vmatprep.subr.mxu0 0.0
    %268 = vmatpush2.msra.mxu0 0.0
    %269 = vmatprep.subr.mxu0 0.0
    %270 = vmatpush2.msra.mxu0 0.0
    %271 = vmatprep.subr.mxu0 0.0
    %272 = vmatpush2.msra.mxu0 0.0
    %273 = vmatprep.subr.mxu0 0.0
    %274 = vmatpush2.msra.mxu0 0.0
    %275 = vmatprep.subr.mxu0 0.0
    %276 = vmatpush2.msra.mxu0 0.0
    %277 = vmatprep.subr.mxu0 0.0
    %278 = vmatpush2.msra.mxu0 0.0
    %279 = vmatprep.subr.mxu0 0.0
    %280 = vmatpush2.msra.mxu0 0.0
    %281 = vmatprep.mubr.f32.mxu0 0.0
    %282 = vmatmul.mubr.f32.gmra.mxu0 %v215
    %v283 = vpop.f32.mrf.mxu0
    %v284 = vadd.f32 0.0, %v283
    %v285 = vpop.f32.mrf.mxu0
    %286 = vdwg.mxu0
    %v287 = vadd.f32 %v183, %v284
    %v288 = vadd.f32 %v208, %v284
    %v289 = vxor.u32 %v287, 2147483648
    %v290 = vmul.f32 %v289, 1.442695
    %v291 = vpow.pop %v290
    %v292 = vadd.f32 %v291, 1.0
    %v293 = vrcp.pop %v292
    %v294 = vmul.f32 1.0, %v293
    %v295 = vtanh.pop %v287
    %v296 = vmul.f32 %v294, 0.0
    %298 = vrot.lane.b32.xlu0 %v295, 96
    %v299 = vpop.permute.xlu0 %298
    %v301 = vmul.f32 %v294, %v299
    %303 = vrot.lane.b32.xlu0 %v301, 16
    %v304 = vpop.permute.xlu0 %303
    %v306 = vadd.f32 %v296, %v304
    %v307 = vtanh.pop %v306
    %309 = vrot.lane.b32.xlu0 %v307, 32
    %v310 = vpop.permute.xlu0 %309
    %v312 = vmul.f32 %v294, %v310
    %v313 = vxor.u32 %v288, 2147483648
    %v314 = vmul.f32 %v313, 1.442695
    %v315 = vpow.pop %v314
    %v316 = vadd.f32 %v315, 1.0
    %v317 = vrcp.pop %v316
    %v318 = vmul.f32 1.0, %v317
    %v319 = vtanh.pop %v288
    %v320 = vmul.f32 %v318, 0.0
    %322 = vrot.lane.b32.xlu0 %v319, 96
    %v323 = vpop.permute.xlu0 %322
    %v325 = vmul.f32 %v318, %v323
    %327 = vrot.lane.b32.xlu0 %v325, 16
    %v328 = vpop.permute.xlu0 %327
    %v330 = vadd.f32 %v320, %v328
    %v331 = vtanh.pop %v330
    %333 = vrot.lane.b32.xlu0 %v331, 32
    %v334 = vpop.permute.xlu0 %333
    %v336 = vmul.f32 %v318, %v334
    %338 = vrot.lane.b32.xlu0 %v312, 80
    %v339 = vpop.permute.xlu0 %338
    %342 = vrot.lane.b32.xlu0 %v336, 32
    %v343 = vpop.permute.xlu0 %342
    %v345 = vsel %vm107, %v339, %v343
    %v347 = vsel %vm213, %v345, 0
    %349 = vmatprep.subr.mxu0 0.0
    %350 = vmatpush1.msra.mxu0 0.0
    %351 = vmatprep.subr.mxu0 0.0
    %352 = vmatpush1.msra.mxu0 0.0
    %353 = vmatprep.subr.mxu0 0.0
    %354 = vmatpush1.msra.mxu0 0.0
    %355 = vmatprep.subr.mxu0 0.0
    %356 = vmatpush1.msra.mxu0 0.0
    %357 = vmatprep.subr.mxu0 0.0
    %358 = vmatpush1.msra.mxu0 0.0
    %359 = vmatprep.subr.mxu0 0.0
    %360 = vmatpush1.msra.mxu0 0.0
    %361 = vmatprep.subr.mxu0 0.0
    %362 = vmatpush1.msra.mxu0 0.0
    %363 = vmatprep.subr.mxu0 0.0
    %364 = vmatpush1.msra.mxu0 0.0
    %365 = vmatprep.subr.mxu0 0.0
    %366 = vmatpush1.msra.mxu0 0.0
    %367 = vmatprep.subr.mxu0 0.0
    %368 = vmatpush1.msra.mxu0 0.0
    %369 = vmatprep.subr.mxu0 0.0
    %370 = vmatpush1.msra.mxu0 0.0
    %371 = vmatprep.subr.mxu0 0.0
    %372 = vmatpush1.msra.mxu0 0.0
    %373 = vmatprep.subr.mxu0 0.0
    %374 = vmatpush1.msra.mxu0 %v77
    %375 = vmatprep.subr.mxu0 0.0
    %376 = vmatpush1.msra.mxu0 %v76
    %377 = vmatprep.subr.mxu0 0.0
    %378 = vmatpush1.msra.mxu0 %v75
    %379 = vmatprep.subr.mxu0 0.0
    %380 = vmatpush1.msra.mxu0 %v74
    %381 = vmatprep.subr.mxu0 0.0
    %382 = vmatpush2.msra.mxu0 0.0
    %383 = vmatprep.subr.mxu0 0.0
    %384 = vmatpush2.msra.mxu0 0.0
    %385 = vmatprep.subr.mxu0 0.0
    %386 = vmatpush2.msra.mxu0 0.0
    %387 = vmatprep.subr.mxu0 0.0
    %388 = vmatpush2.msra.mxu0 0.0
    %389 = vmatprep.subr.mxu0 0.0
    %390 = vmatpush2.msra.mxu0 0.0
    %391 = vmatprep.subr.mxu0 0.0
    %392 = vmatpush2.msra.mxu0 0.0
    %393 = vmatprep.subr.mxu0 0.0
    %394 = vmatpush2.msra.mxu0 0.0
    %395 = vmatprep.subr.mxu0 0.0
    %396 = vmatpush2.msra.mxu0 0.0
    %397 = vmatprep.subr.mxu0 0.0
    %398 = vmatpush2.msra.mxu0 0.0
    %399 = vmatprep.subr.mxu0 0.0
    %400 = vmatpush2.msra.mxu0 0.0
    %401 = vmatprep.subr.mxu0 0.0
    %402 = vmatpush2.msra.mxu0 0.0
    %403 = vmatprep.subr.mxu0 0.0
    %404 = vmatpush2.msra.mxu0 0.0
    %405 = vmatprep.subr.mxu0 0.0
    %406 = vmatpush2.msra.mxu0 0.0
    %407 = vmatprep.subr.mxu0 0.0
    %408 = vmatpush2.msra.mxu0 0.0
    %409 = vmatprep.subr.mxu0 0.0
    %410 = vmatpush2.msra.mxu0 0.0
    %411 = vmatprep.subr.mxu0 0.0
    %412 = vmatpush2.msra.mxu0 0.0
    %413 = vmatprep.mubr.f32.mxu0 0.0
    %414 = vmatmul.mubr.f32.gmra.mxu0 %v347
    %v415 = vpop.f32.mrf.mxu0
    %v416 = vadd.f32 0.0, %v415
    %v417 = vpop.f32.mrf.mxu0
    %418 = vdwg.mxu0
    %v419 = vadd.f32 %v205, %v416
    %v420 = vadd.f32 %v198, %v416
    %v421 = vxor.u32 %v419, 2147483648
    %v422 = vmul.f32 %v421, 1.442695
    %v423 = vpow.pop %v422
    %v424 = vadd.f32 %v423, 1.0
    %v425 = vrcp.pop %v424
    %v426 = vmul.f32 1.0, %v425
    %v427 = vtanh.pop %v419
    %v428 = vmul.f32 %v426, %v306
    %430 = vrot.lane.b32.xlu0 %v427, 96
    %v431 = vpop.permute.xlu0 %430
    %v433 = vmul.f32 %v426, %v431
    %435 = vrot.lane.b32.xlu0 %v433, 16
    %v436 = vpop.permute.xlu0 %435
    %v438 = vadd.f32 %v428, %v436
    %v439 = vtanh.pop %v438
    %441 = vrot.lane.b32.xlu0 %v439, 32
    %v442 = vpop.permute.xlu0 %441
    %v444 = vmul.f32 %v426, %v442
    %v445 = vxor.u32 %v420, 2147483648
    %v446 = vmul.f32 %v445, 1.442695
    %v447 = vpow.pop %v446
    %v448 = vadd.f32 %v447, 1.0
    %v449 = vrcp.pop %v448
    %v450 = vmul.f32 1.0, %v449
    %v451 = vtanh.pop %v420
    %v452 = vmul.f32 %v450, %v330
    %454 = vrot.lane.b32.xlu0 %v451, 96
    %v455 = vpop.permute.xlu0 %454
    %v457 = vmul.f32 %v450, %v455
    %459 = vrot.lane.b32.xlu0 %v457, 16
    %v460 = vpop.permute.xlu0 %459
    %v462 = vadd.f32 %v452, %v460
    %v463 = vtanh.pop %v462
    %465 = vrot.lane.b32.xlu0 %v463, 32
    %v466 = vpop.permute.xlu0 %465
    %v468 = vmul.f32 %v450, %v466
    %470 = vrot.lane.b32.xlu0 %v444, 80
    %v471 = vpop.permute.xlu0 %470
    %474 = vrot.lane.b32.xlu0 %v468, 32
    %v475 = vpop.permute.xlu0 %474
    %v477 = vsel %vm107, %v471, %v475
    %v479 = vsel %vm213, %v477, 0
    %481 = vmatprep.subr.mxu0 0.0
    %482 = vmatpush1.msra.mxu0 0.0
    %483 = vmatprep.subr.mxu0 0.0
    %484 = vmatpush1.msra.mxu0 0.0
    %485 = vmatprep.subr.mxu0 0.0
    %486 = vmatpush1.msra.mxu0 0.0
    %487 = vmatprep.subr.mxu0 0.0
    %488 = vmatpush1.msra.mxu0 0.0
    %489 = vmatprep.subr.mxu0 0.0
    %490 = vmatpush1.msra.mxu0 0.0
    %491 = vmatprep.subr.mxu0 0.0
    %492 = vmatpush1.msra.mxu0 0.0
    %493 = vmatprep.subr.mxu0 0.0
    %494 = vmatpush1.msra.mxu0 0.0
    %495 = vmatprep.subr.mxu0 0.0
    %496 = vmatpush1.msra.mxu0 0.0
    %497 = vmatprep.subr.mxu0 0.0
    %498 = vmatpush1.msra.mxu0 0.0
    %499 = vmatprep.subr.mxu0 0.0
    %500 = vmatpush1.msra.mxu0 0.0
    %501 = vmatprep.subr.mxu0 0.0
    %502 = vmatpush1.msra.mxu0 0.0
    %503 = vmatprep.subr.mxu0 0.0
    %504 = vmatpush1.msra.mxu0 0.0
    %505 = vmatprep.subr.mxu0 0.0
    %506 = vmatpush1.msra.mxu0 %v77
    %507 = vmatprep.subr.mxu0 0.0
    %508 = vmatpush1.msra.mxu0 %v76
    %509 = vmatprep.subr.mxu0 0.0
    %510 = vmatpush1.msra.mxu0 %v75
    %511 = vmatprep.subr.mxu0 0.0
    %512 = vmatpush1.msra.mxu0 %v74
    %513 = vmatprep.subr.mxu0 0.0
    %514 = vmatpush2.msra.mxu0 0.0
    %515 = vmatprep.subr.mxu0 0.0
    %516 = vmatpush2.msra.mxu0 0.0
    %517 = vmatprep.subr.mxu0 0.0
    %518 = vmatpush2.msra.mxu0 0.0
    %519 = vmatprep.subr.mxu0 0.0
    %520 = vmatpush2.msra.mxu0 0.0
    %521 = vmatprep.subr.mxu0 0.0
    %522 = vmatpush2.msra.mxu0 0.0
    %523 = vmatprep.subr.mxu0 0.0
    %524 = vmatpush2.msra.mxu0 0.0
    %525 = vmatprep.subr.mxu0 0.0
    %526 = vmatpush2.msra.mxu0 0.0
    %527 = vmatprep.subr.mxu0 0.0
    %528 = vmatpush2.msra.mxu0 0.0
    %529 = vmatprep.subr.mxu0 0.0
    %530 = vmatpush2.msra.mxu0 0.0
    %531 = vmatprep.subr.mxu0 0.0
    %532 = vmatpush2.msra.mxu0 0.0
    %533 = vmatprep.subr.mxu0 0.0
    %534 = vmatpush2.msra.mxu0 0.0
    %535 = vmatprep.subr.mxu0 0.0
    %536 = vmatpush2.msra.mxu0 0.0
    %537 = vmatprep.subr.mxu0 0.0
    %538 = vmatpush2.msra.mxu0 0.0
    %539 = vmatprep.subr.mxu0 0.0
    %540 = vmatpush2.msra.mxu0 0.0
    %541 = vmatprep.subr.mxu0 0.0
    %542 = vmatpush2.msra.mxu0 0.0
    %543 = vmatprep.subr.mxu0 0.0
    %544 = vmatpush2.msra.mxu0 0.0
    %545 = vmatprep.mubr.f32.mxu0 0.0
    %546 = vmatmul.mubr.f32.gmra.mxu0 %v479
    %v547 = vpop.f32.mrf.mxu0
    %v548 = vadd.f32 0.0, %v547
    %v549 = vpop.f32.mrf.mxu0
    %550 = vdwg.mxu0
    %v551 = vadd.f32 %v188, %v548
    %v552 = vadd.f32 %v207, %v548
    %v553 = vxor.u32 %v551, 2147483648
    %v554 = vmul.f32 %v553, 1.442695
    %v555 = vpow.pop %v554
    %v556 = vadd.f32 %v555, 1.0
    %v557 = vrcp.pop %v556
    %v558 = vmul.f32 1.0, %v557
    %v559 = vtanh.pop %v551
    %v560 = vmul.f32 %v558, %v438
    %562 = vrot.lane.b32.xlu0 %v559, 96
    %v563 = vpop.permute.xlu0 %562
    %v565 = vmul.f32 %v558, %v563
    %567 = vrot.lane.b32.xlu0 %v565, 16
    %v568 = vpop.permute.xlu0 %567
    %v570 = vadd.f32 %v560, %v568
    %v571 = vtanh.pop %v570
    %573 = vrot.lane.b32.xlu0 %v571, 32
    %v574 = vpop.permute.xlu0 %573
    %v576 = vmul.f32 %v558, %v574
    %v577 = vxor.u32 %v552, 2147483648
    %v578 = vmul.f32 %v577, 1.442695
    %v579 = vpow.pop %v578
    %v580 = vadd.f32 %v579, 1.0
    %v581 = vrcp.pop %v580
    %v582 = vmul.f32 1.0, %v581
    %v583 = vtanh.pop %v552
    %v584 = vmul.f32 %v582, %v462
    %586 = vrot.lane.b32.xlu0 %v583, 96
    %v587 = vpop.permute.xlu0 %586
    %v589 = vmul.f32 %v582, %v587
    %591 = vrot.lane.b32.xlu0 %v589, 16
    %v592 = vpop.permute.xlu0 %591
    %v594 = vadd.f32 %v584, %v592
    %v595 = vtanh.pop %v594
    %597 = vrot.lane.b32.xlu0 %v595, 32
    %v598 = vpop.permute.xlu0 %597
    %v600 = vmul.f32 %v582, %v598
    %602 = vrot.lane.b32.xlu0 %v576, 80
    %v603 = vpop.permute.xlu0 %602
    %606 = vrot.lane.b32.xlu0 %v600, 32
    %v607 = vpop.permute.xlu0 %606
    %v609 = vsel %vm107, %v603, %v607
    %v611 = vsel %vm213, %v609, 0
    %613 = vmatprep.subr.mxu0 0.0
    %614 = vmatpush1.msra.mxu0 0.0
    %615 = vmatprep.subr.mxu0 0.0
    %616 = vmatpush1.msra.mxu0 0.0
    %617 = vmatprep.subr.mxu0 0.0
    %618 = vmatpush1.msra.mxu0 0.0
    %619 = vmatprep.subr.mxu0 0.0
    %620 = vmatpush1.msra.mxu0 0.0
    %621 = vmatprep.subr.mxu0 0.0
    %622 = vmatpush1.msra.mxu0 0.0
    %623 = vmatprep.subr.mxu0 0.0
    %624 = vmatpush1.msra.mxu0 0.0
    %625 = vmatprep.subr.mxu0 0.0
    %626 = vmatpush1.msra.mxu0 0.0
    %627 = vmatprep.subr.mxu0 0.0
    %628 = vmatpush1.msra.mxu0 0.0
    %629 = vmatprep.subr.mxu0 0.0
    %630 = vmatpush1.msra.mxu0 0.0
    %631 = vmatprep.subr.mxu0 0.0
    %632 = vmatpush1.msra.mxu0 0.0
    %633 = vmatprep.subr.mxu0 0.0
    %634 = vmatpush1.msra.mxu0 0.0
    %635 = vmatprep.subr.mxu0 0.0
    %636 = vmatpush1.msra.mxu0 0.0
    %637 = vmatprep.subr.mxu0 0.0
    %638 = vmatpush1.msra.mxu0 %v77
    %639 = vmatprep.subr.mxu0 0.0
    %640 = vmatpush1.msra.mxu0 %v76
    %641 = vmatprep.subr.mxu0 0.0
    %642 = vmatpush1.msra.mxu0 %v75
    %643 = vmatprep.subr.mxu0 0.0
    %644 = vmatpush1.msra.mxu0 %v74
    %645 = vmatprep.subr.mxu0 0.0
    %646 = vmatpush2.msra.mxu0 0.0
    %647 = vmatprep.subr.mxu0 0.0
    %648 = vmatpush2.msra.mxu0 0.0
    %649 = vmatprep.subr.mxu0 0.0
    %650 = vmatpush2.msra.mxu0 0.0
    %651 = vmatprep.subr.mxu0 0.0
    %652 = vmatpush2.msra.mxu0 0.0
    %653 = vmatprep.subr.mxu0 0.0
    %654 = vmatpush2.msra.mxu0 0.0
    %655 = vmatprep.subr.mxu0 0.0
    %656 = vmatpush2.msra.mxu0 0.0
    %657 = vmatprep.subr.mxu0 0.0
    %658 = vmatpush2.msra.mxu0 0.0
    %659 = vmatprep.subr.mxu0 0.0
    %660 = vmatpush2.msra.mxu0 0.0
    %661 = vmatprep.subr.mxu0 0.0
    %662 = vmatpush2.msra.mxu0 0.0
    %663 = vmatprep.subr.mxu0 0.0
    %664 = vmatpush2.msra.mxu0 0.0
    %665 = vmatprep.subr.mxu0 0.0
    %666 = vmatpush2.msra.mxu0 0.0
    %667 = vmatprep.subr.mxu0 0.0
    %668 = vmatpush2.msra.mxu0 0.0
    %669 = vmatprep.subr.mxu0 0.0
    %670 = vmatpush2.msra.mxu0 0.0
    %671 = vmatprep.subr.mxu0 0.0
    %672 = vmatpush2.msra.mxu0 0.0
    %673 = vmatprep.subr.mxu0 0.0
    %674 = vmatpush2.msra.mxu0 0.0
    %675 = vmatprep.subr.mxu0 0.0
    %676 = vmatpush2.msra.mxu0 0.0
    %677 = vmatprep.mubr.f32.mxu0 0.0
    %678 = vmatmul.mubr.f32.gmra.mxu0 %v611
    %v679 = vpop.f32.mrf.mxu0
    %v680 = vadd.f32 0.0, %v679
    %v681 = vpop.f32.mrf.mxu0
    %682 = vdwg.mxu0
    %v683 = vadd.f32 %v206, %v680
    %v684 = vadd.f32 %v193, %v680
    %v685 = vxor.u32 %v683, 2147483648
    %v686 = vmul.f32 %v685, 1.442695
    %v687 = vpow.pop %v686
    %v688 = vadd.f32 %v687, 1.0
    %v689 = vrcp.pop %v688
    %v690 = vmul.f32 1.0, %v689
    %v691 = vtanh.pop %v683
    %v692 = vmul.f32 %v690, %v570
    %694 = vrot.lane.b32.xlu0 %v691, 96
    %v695 = vpop.permute.xlu0 %694
    %v697 = vmul.f32 %v690, %v695
    %699 = vrot.lane.b32.xlu0 %v697, 16
    %v700 = vpop.permute.xlu0 %699
    %v702 = vadd.f32 %v692, %v700
    %v703 = vtanh.pop %v702
    %705 = vrot.lane.b32.xlu0 %v703, 32
    %v706 = vpop.permute.xlu0 %705
    %v708 = vmul.f32 %v690, %v706
    %v709 = vxor.u32 %v684, 2147483648
    %v710 = vmul.f32 %v709, 1.442695
    %v711 = vpow.pop %v710
    %v712 = vadd.f32 %v711, 1.0
    %v713 = vrcp.pop %v712
    %v714 = vmul.f32 1.0, %v713
    %v715 = vtanh.pop %v684
    %v716 = vmul.f32 %v714, %v594
    %718 = vrot.lane.b32.xlu0 %v715, 96
    %v719 = vpop.permute.xlu0 %718
    %v721 = vmul.f32 %v714, %v719
    %723 = vrot.lane.b32.xlu0 %v721, 16
    %v724 = vpop.permute.xlu0 %723
    %v726 = vadd.f32 %v716, %v724
    %v727 = vtanh.pop %v726
    %729 = vrot.lane.b32.xlu0 %v727, 32
    %v730 = vpop.permute.xlu0 %729
    %v732 = vmul.f32 %v714, %v730
    %734 = vrot.lane.b32.xlu0 %v708, 80
    %v735 = vpop.permute.xlu0 %734
    %738 = vrot.lane.b32.xlu0 %v732, 32
    %v739 = vpop.permute.xlu0 %738
    %v741 = vsel %vm107, %v735, %v739
    %v743 = vsel %vm213, %v741, 0
    %745 = vmatprep.subr.mxu0 0.0
    %746 = vmatpush1.msra.mxu0 0.0
    %747 = vmatprep.subr.mxu0 0.0
    %748 = vmatpush1.msra.mxu0 0.0
    %749 = vmatprep.subr.mxu0 0.0
    %750 = vmatpush1.msra.mxu0 0.0
    %751 = vmatprep.subr.mxu0 0.0
    %752 = vmatpush1.msra.mxu0 0.0
    %753 = vmatprep.subr.mxu0 0.0
    %754 = vmatpush1.msra.mxu0 0.0
    %755 = vmatprep.subr.mxu0 0.0
    %756 = vmatpush1.msra.mxu0 0.0
    %757 = vmatprep.subr.mxu0 0.0
    %758 = vmatpush1.msra.mxu0 0.0
    %759 = vmatprep.subr.mxu0 0.0
    %760 = vmatpush1.msra.mxu0 0.0
    %761 = vmatprep.subr.mxu0 0.0
    %762 = vmatpush1.msra.mxu0 0.0
    %763 = vmatprep.subr.mxu0 0.0
    %764 = vmatpush1.msra.mxu0 0.0
    %765 = vmatprep.subr.mxu0 0.0
    %766 = vmatpush1.msra.mxu0 0.0
    %767 = vmatprep.subr.mxu0 0.0
    %768 = vmatpush1.msra.mxu0 0.0
    %769 = vmatprep.subr.mxu0 0.0
    %770 = vmatpush1.msra.mxu0 %v77
    %771 = vmatprep.subr.mxu0 0.0
    %772 = vmatpush1.msra.mxu0 %v76
    %773 = vmatprep.subr.mxu0 0.0
    %774 = vmatpush1.msra.mxu0 %v75
    %775 = vmatprep.subr.mxu0 0.0
    %776 = vmatpush1.msra.mxu0 %v74
    %777 = vmatprep.subr.mxu0 0.0
    %778 = vmatpush2.msra.mxu0 0.0
    %779 = vmatprep.subr.mxu0 0.0
    %780 = vmatpush2.msra.mxu0 0.0
    %781 = vmatprep.subr.mxu0 0.0
    %782 = vmatpush2.msra.mxu0 0.0
    %783 = vmatprep.subr.mxu0 0.0
    %784 = vmatpush2.msra.mxu0 0.0
    %785 = vmatprep.subr.mxu0 0.0
    %786 = vmatpush2.msra.mxu0 0.0
    %787 = vmatprep.subr.mxu0 0.0
    %788 = vmatpush2.msra.mxu0 0.0
    %789 = vmatprep.subr.mxu0 0.0
    %790 = vmatpush2.msra.mxu0 0.0
    %791 = vmatprep.subr.mxu0 0.0
    %792 = vmatpush2.msra.mxu0 0.0
    %793 = vmatprep.subr.mxu0 0.0
    %794 = vmatpush2.msra.mxu0 0.0
    %795 = vmatprep.subr.mxu0 0.0
    %796 = vmatpush2.msra.mxu0 0.0
    %797 = vmatprep.subr.mxu0 0.0
    %798 = vmatpush2.msra.mxu0 0.0
    %799 = vmatprep.subr.mxu0 0.0
    %800 = vmatpush2.msra.mxu0 0.0
    %801 = vmatprep.subr.mxu0 0.0
    %802 = vmatpush2.msra.mxu0 0.0
    %803 = vmatprep.subr.mxu0 0.0
    %804 = vmatpush2.msra.mxu0 0.0
    %805 = vmatprep.subr.mxu0 0.0
    %806 = vmatpush2.msra.mxu0 0.0
    %807 = vmatprep.subr.mxu0 0.0
    %808 = vmatpush2.msra.mxu0 0.0
    %809 = vmatprep.mubr.f32.mxu0 0.0
    %810 = vmatmul.mubr.f32.gmra.mxu0 %v743
    %v811 = vpop.f32.mrf.mxu0
    %v812 = vadd.f32 0.0, %v811
    %v813 = vpop.f32.mrf.mxu0
    %814 = vdwg.mxu0
    %v815 = vadd.f32 %v193, %v812
    %v816 = vadd.f32 %v206, %v812
    %v817 = vxor.u32 %v815, 2147483648
    %v818 = vmul.f32 %v817, 1.442695
    %v819 = vpow.pop %v818
    %v820 = vadd.f32 %v819, 1.0
    %v821 = vrcp.pop %v820
    %v822 = vmul.f32 1.0, %v821
    %v823 = vtanh.pop %v815
    %v824 = vmul.f32 %v822, %v702
    %826 = vrot.lane.b32.xlu0 %v823, 96
    %v827 = vpop.permute.xlu0 %826
    %v829 = vmul.f32 %v822, %v827
    %831 = vrot.lane.b32.xlu0 %v829, 16
    %v832 = vpop.permute.xlu0 %831
    %v834 = vadd.f32 %v824, %v832
    %v835 = vtanh.pop %v834
    %837 = vrot.lane.b32.xlu0 %v835, 32
    %v838 = vpop.permute.xlu0 %837
    %v840 = vmul.f32 %v822, %v838
    %v841 = vxor.u32 %v816, 2147483648
    %v842 = vmul.f32 %v841, 1.442695
    %v843 = vpow.pop %v842
    %v844 = vadd.f32 %v843, 1.0
    %v845 = vrcp.pop %v844
    %v846 = vmul.f32 1.0, %v845
    %v847 = vtanh.pop %v816
    %v848 = vmul.f32 %v846, %v726
    %850 = vrot.lane.b32.xlu0 %v847, 96
    %v851 = vpop.permute.xlu0 %850
    %v853 = vmul.f32 %v846, %v851
    %855 = vrot.lane.b32.xlu0 %v853, 16
    %v856 = vpop.permute.xlu0 %855
    %v858 = vadd.f32 %v848, %v856
    %v859 = vtanh.pop %v858
    %861 = vrot.lane.b32.xlu0 %v859, 32
    %v862 = vpop.permute.xlu0 %861
    %v864 = vmul.f32 %v846, %v862
    %866 = vrot.lane.b32.xlu0 %v840, 80
    %v867 = vpop.permute.xlu0 %866
    %870 = vrot.lane.b32.xlu0 %v864, 32
    %v871 = vpop.permute.xlu0 %870
    %v873 = vsel %vm107, %v867, %v871
    %v875 = vsel %vm213, %v873, 0
    %877 = vmatprep.subr.mxu0 0.0
    %878 = vmatpush1.msra.mxu0 0.0
    %879 = vmatprep.subr.mxu0 0.0
    %880 = vmatpush1.msra.mxu0 0.0
    %881 = vmatprep.subr.mxu0 0.0
    %882 = vmatpush1.msra.mxu0 0.0
    %883 = vmatprep.subr.mxu0 0.0
    %884 = vmatpush1.msra.mxu0 0.0
    %885 = vmatprep.subr.mxu0 0.0
    %886 = vmatpush1.msra.mxu0 0.0
    %887 = vmatprep.subr.mxu0 0.0
    %888 = vmatpush1.msra.mxu0 0.0
    %889 = vmatprep.subr.mxu0 0.0
    %890 = vmatpush1.msra.mxu0 0.0
    %891 = vmatprep.subr.mxu0 0.0
    %892 = vmatpush1.msra.mxu0 0.0
    %893 = vmatprep.subr.mxu0 0.0
    %894 = vmatpush1.msra.mxu0 0.0
    %895 = vmatprep.subr.mxu0 0.0
    %896 = vmatpush1.msra.mxu0 0.0
    %897 = vmatprep.subr.mxu0 0.0
    %898 = vmatpush1.msra.mxu0 0.0
    %899 = vmatprep.subr.mxu0 0.0
    %900 = vmatpush1.msra.mxu0 0.0
    %901 = vmatprep.subr.mxu0 0.0
    %902 = vmatpush1.msra.mxu0 %v77
    %903 = vmatprep.subr.mxu0 0.0
    %904 = vmatpush1.msra.mxu0 %v76
    %905 = vmatprep.subr.mxu0 0.0
    %906 = vmatpush1.msra.mxu0 %v75
    %907 = vmatprep.subr.mxu0 0.0
    %908 = vmatpush1.msra.mxu0 %v74
    %909 = vmatprep.subr.mxu0 0.0
    %910 = vmatpush2.msra.mxu0 0.0
    %911 = vmatprep.subr.mxu0 0.0
    %912 = vmatpush2.msra.mxu0 0.0
    %913 = vmatprep.subr.mxu0 0.0
    %914 = vmatpush2.msra.mxu0 0.0
    %915 = vmatprep.subr.mxu0 0.0
    %916 = vmatpush2.msra.mxu0 0.0
    %917 = vmatprep.subr.mxu0 0.0
    %918 = vmatpush2.msra.mxu0 0.0
    %919 = vmatprep.subr.mxu0 0.0
    %920 = vmatpush2.msra.mxu0 0.0
    %921 = vmatprep.subr.mxu0 0.0
    %922 = vmatpush2.msra.mxu0 0.0
    %923 = vmatprep.subr.mxu0 0.0
    %924 = vmatpush2.msra.mxu0 0.0
    %925 = vmatprep.subr.mxu0 0.0
    %926 = vmatpush2.msra.mxu0 0.0
    %927 = vmatprep.subr.mxu0 0.0
    %928 = vmatpush2.msra.mxu0 0.0
    %929 = vmatprep.subr.mxu0 0.0
    %930 = vmatpush2.msra.mxu0 0.0
    %931 = vmatprep.subr.mxu0 0.0
    %932 = vmatpush2.msra.mxu0 0.0
    %933 = vmatprep.subr.mxu0 0.0
    %934 = vmatpush2.msra.mxu0 0.0
    %935 = vmatprep.subr.mxu0 0.0
    %936 = vmatpush2.msra.mxu0 0.0
    %937 = vmatprep.subr.mxu0 0.0
    %938 = vmatpush2.msra.mxu0 0.0
    %939 = vmatprep.subr.mxu0 0.0
    %940 = vmatpush2.msra.mxu0 0.0
    %941 = vmatprep.mubr.f32.mxu0 0.0
    %942 = vmatmul.mubr.f32.gmra.mxu0 %v875
    %v943 = vpop.f32.mrf.mxu0
    %v944 = vadd.f32 0.0, %v943
    %v945 = vpop.f32.mrf.mxu0
    %946 = vdwg.mxu0
    %v947 = vadd.f32 %v207, %v944
    %v948 = vadd.f32 %v188, %v944
    %v949 = vxor.u32 %v947, 2147483648
    %v950 = vmul.f32 %v949, 1.442695
    %v951 = vpow.pop %v950
    %v952 = vadd.f32 %v951, 1.0
    %v953 = vrcp.pop %v952
    %v954 = vmul.f32 1.0, %v953
    %v955 = vtanh.pop %v947
    %v956 = vmul.f32 %v954, %v834
    %958 = vrot.lane.b32.xlu0 %v955, 96
    %v959 = vpop.permute.xlu0 %958
    %v961 = vmul.f32 %v954, %v959
    %963 = vrot.lane.b32.xlu0 %v961, 16
    %v964 = vpop.permute.xlu0 %963
    %v966 = vadd.f32 %v956, %v964
    %v967 = vtanh.pop %v966
    %969 = vrot.lane.b32.xlu0 %v967, 32
    %v970 = vpop.permute.xlu0 %969
    %v972 = vmul.f32 %v954, %v970
    %v973 = vxor.u32 %v948, 2147483648
    %v974 = vmul.f32 %v973, 1.442695
    %v975 = vpow.pop %v974
    %v976 = vadd.f32 %v975, 1.0
    %v977 = vrcp.pop %v976
    %v978 = vmul.f32 1.0, %v977
    %v979 = vtanh.pop %v948
    %v980 = vmul.f32 %v978, %v858
    %982 = vrot.lane.b32.xlu0 %v979, 96
    %v983 = vpop.permute.xlu0 %982
    %v985 = vmul.f32 %v978, %v983
    %987 = vrot.lane.b32.xlu0 %v985, 16
    %v988 = vpop.permute.xlu0 %987
    %v990 = vadd.f32 %v980, %v988
    %v991 = vtanh.pop %v990
    %993 = vrot.lane.b32.xlu0 %v991, 32
    %v994 = vpop.permute.xlu0 %993
    %v996 = vmul.f32 %v978, %v994
    %998 = vrot.lane.b32.xlu0 %v972, 80
    %v999 = vpop.permute.xlu0 %998
    %1002 = vrot.lane.b32.xlu0 %v996, 32
    %v1003 = vpop.permute.xlu0 %1002
    %v1005 = vsel %vm107, %v999, %v1003
    %v1007 = vsel %vm213, %v1005, 0
    %1009 = vmatprep.subr.mxu0 0.0
    %1010 = vmatpush1.msra.mxu0 0.0
    %1011 = vmatprep.subr.mxu0 0.0
    %1012 = vmatpush1.msra.mxu0 0.0
    %1013 = vmatprep.subr.mxu0 0.0
    %1014 = vmatpush1.msra.mxu0 0.0
    %1015 = vmatprep.subr.mxu0 0.0
    %1016 = vmatpush1.msra.mxu0 0.0
    %1017 = vmatprep.subr.mxu0 0.0
    %1018 = vmatpush1.msra.mxu0 0.0
    %1019 = vmatprep.subr.mxu0 0.0
    %1020 = vmatpush1.msra.mxu0 0.0
    %1021 = vmatprep.subr.mxu0 0.0
    %1022 = vmatpush1.msra.mxu0 0.0
    %1023 = vmatprep.subr.mxu0 0.0
    %1024 = vmatpush1.msra.mxu0 0.0
    %1025 = vmatprep.subr.mxu0 0.0
    %1026 = vmatpush1.msra.mxu0 0.0
    %1027 = vmatprep.subr.mxu0 0.0
    %1028 = vmatpush1.msra.mxu0 0.0
    %1029 = vmatprep.subr.mxu0 0.0
    %1030 = vmatpush1.msra.mxu0 0.0
    %1031 = vmatprep.subr.mxu0 0.0
    %1032 = vmatpush1.msra.mxu0 0.0
    %1033 = vmatprep.subr.mxu0 0.0
    %1034 = vmatpush1.msra.mxu0 %v77
    %1035 = vmatprep.subr.mxu0 0.0
    %1036 = vmatpush1.msra.mxu0 %v76
    %1037 = vmatprep.subr.mxu0 0.0
    %1038 = vmatpush1.msra.mxu0 %v75
    %1039 = vmatprep.subr.mxu0 0.0
    %1040 = vmatpush1.msra.mxu0 %v74
    %1041 = vmatprep.subr.mxu0 0.0
    %1042 = vmatpush2.msra.mxu0 0.0
    %1043 = vmatprep.subr.mxu0 0.0
    %1044 = vmatpush2.msra.mxu0 0.0
    %1045 = vmatprep.subr.mxu0 0.0
    %1046 = vmatpush2.msra.mxu0 0.0
    %1047 = vmatprep.subr.mxu0 0.0
    %1048 = vmatpush2.msra.mxu0 0.0
    %1049 = vmatprep.subr.mxu0 0.0
    %1050 = vmatpush2.msra.mxu0 0.0
    %1051 = vmatprep.subr.mxu0 0.0
    %1052 = vmatpush2.msra.mxu0 0.0
    %1053 = vmatprep.subr.mxu0 0.0
    %1054 = vmatpush2.msra.mxu0 0.0
    %1055 = vmatprep.subr.mxu0 0.0
    %1056 = vmatpush2.msra.mxu0 0.0
    %1057 = vmatprep.subr.mxu0 0.0
    %1058 = vmatpush2.msra.mxu0 0.0
    %1059 = vmatprep.subr.mxu0 0.0
    %1060 = vmatpush2.msra.mxu0 0.0
    %1061 = vmatprep.subr.mxu0 0.0
    %1062 = vmatpush2.msra.mxu0 0.0
    %1063 = vmatprep.subr.mxu0 0.0
    %1064 = vmatpush2.msra.mxu0 0.0
    %1065 = vmatprep.subr.mxu0 0.0
    %1066 = vmatpush2.msra.mxu0 0.0
    %1067 = vmatprep.subr.mxu0 0.0
    %1068 = vmatpush2.msra.mxu0 0.0
    %1069 = vmatprep.subr.mxu0 0.0
    %1070 = vmatpush2.msra.mxu0 0.0
    %1071 = vmatprep.subr.mxu0 0.0
    %1072 = vmatpush2.msra.mxu0 0.0
    %1073 = vmatprep.mubr.f32.mxu0 0.0
    %1074 = vmatmul.mubr.f32.gmra.mxu0 %v1007
    %v1075 = vpop.f32.mrf.mxu0
    %v1076 = vadd.f32 0.0, %v1075
    %v1077 = vpop.f32.mrf.mxu0
    %1078 = vdwg.mxu0
    %v1079 = vadd.f32 %v198, %v1076
    %v1080 = vadd.f32 %v205, %v1076
    %v1081 = vxor.u32 %v1079, 2147483648
    %v1082 = vmul.f32 %v1081, 1.442695
    %v1083 = vpow.pop %v1082
    %v1084 = vadd.f32 %v1083, 1.0
    %v1085 = vrcp.pop %v1084
    %v1086 = vmul.f32 1.0, %v1085
    %v1087 = vtanh.pop %v1079
    %v1088 = vmul.f32 %v1086, %v966
    %1090 = vrot.lane.b32.xlu0 %v1087, 96
    %v1091 = vpop.permute.xlu0 %1090
    %v1093 = vmul.f32 %v1086, %v1091
    %1095 = vrot.lane.b32.xlu0 %v1093, 16
    %v1096 = vpop.permute.xlu0 %1095
    %v1098 = vadd.f32 %v1088, %v1096
    %v1099 = vtanh.pop %v1098
    %1101 = vrot.lane.b32.xlu0 %v1099, 32
    %v1102 = vpop.permute.xlu0 %1101
    %v1104 = vmul.f32 %v1086, %v1102
    %v1105 = vxor.u32 %v1080, 2147483648
    %v1106 = vmul.f32 %v1105, 1.442695
    %v1107 = vpow.pop %v1106
    %v1108 = vadd.f32 %v1107, 1.0
    %v1109 = vrcp.pop %v1108
    %v1110 = vmul.f32 1.0, %v1109
    %v1111 = vtanh.pop %v1080
    %v1112 = vmul.f32 %v1110, %v990
    %1114 = vrot.lane.b32.xlu0 %v1111, 96
    %v1115 = vpop.permute.xlu0 %1114
    %v1117 = vmul.f32 %v1110, %v1115
    %1119 = vrot.lane.b32.xlu0 %v1117, 16
    %v1120 = vpop.permute.xlu0 %1119
    %v1122 = vadd.f32 %v1112, %v1120
    %v1123 = vtanh.pop %v1122
    %1125 = vrot.lane.b32.xlu0 %v1123, 32
    %v1126 = vpop.permute.xlu0 %1125
    %v1128 = vmul.f32 %v1110, %v1126
    %1130 = vrot.lane.b32.xlu0 %v1104, 80
    %v1131 = vpop.permute.xlu0 %1130
    %1134 = vrot.lane.b32.xlu0 %v1128, 32
    %v1135 = vpop.permute.xlu0 %1134
    %v1137 = vsel %vm107, %v1131, %v1135
    %v1139 = vsel %vm213, %v1137, 0
    %1141 = vmatprep.subr.mxu0 0.0
    %1142 = vmatpush1.msra.mxu0 0.0
    %1143 = vmatprep.subr.mxu0 0.0
    %1144 = vmatpush1.msra.mxu0 0.0
    %1145 = vmatprep.subr.mxu0 0.0
    %1146 = vmatpush1.msra.mxu0 0.0
    %1147 = vmatprep.subr.mxu0 0.0
    %1148 = vmatpush1.msra.mxu0 0.0
    %1149 = vmatprep.subr.mxu0 0.0
    %1150 = vmatpush1.msra.mxu0 0.0
    %1151 = vmatprep.subr.mxu0 0.0
    %1152 = vmatpush1.msra.mxu0 0.0
    %1153 = vmatprep.subr.mxu0 0.0
    %1154 = vmatpush1.msra.mxu0 0.0
    %1155 = vmatprep.subr.mxu0 0.0
    %1156 = vmatpush1.msra.mxu0 0.0
    %1157 = vmatprep.subr.mxu0 0.0
    %1158 = vmatpush1.msra.mxu0 0.0
    %1159 = vmatprep.subr.mxu0 0.0
    %1160 = vmatpush1.msra.mxu0 0.0
    %1161 = vmatprep.subr.mxu0 0.0
    %1162 = vmatpush1.msra.mxu0 0.0
    %1163 = vmatprep.subr.mxu0 0.0
    %1164 = vmatpush1.msra.mxu0 0.0
    %1165 = vmatprep.subr.mxu0 0.0
    %1166 = vmatpush1.msra.mxu0 %v77
    %1167 = vmatprep.subr.mxu0 0.0
    %1168 = vmatpush1.msra.mxu0 %v76
    %1169 = vmatprep.subr.mxu0 0.0
    %1170 = vmatpush1.msra.mxu0 %v75
    %1171 = vmatprep.subr.mxu0 0.0
    %1172 = vmatpush1.msra.mxu0 %v74
    %1173 = vmatprep.subr.mxu0 0.0
    %1174 = vmatpush2.msra.mxu0 0.0
    %1175 = vmatprep.subr.mxu0 0.0
    %1176 = vmatpush2.msra.mxu0 0.0
    %1177 = vmatprep.subr.mxu0 0.0
    %1178 = vmatpush2.msra.mxu0 0.0
    %1179 = vmatprep.subr.mxu0 0.0
    %1180 = vmatpush2.msra.mxu0 0.0
    %1181 = vmatprep.subr.mxu0 0.0
    %1182 = vmatpush2.msra.mxu0 0.0
    %1183 = vmatprep.subr.mxu0 0.0
    %1184 = vmatpush2.msra.mxu0 0.0
    %1185 = vmatprep.subr.mxu0 0.0
    %1186 = vmatpush2.msra.mxu0 0.0
    %1187 = vmatprep.subr.mxu0 0.0
    %1188 = vmatpush2.msra.mxu0 0.0
    %1189 = vmatprep.subr.mxu0 0.0
    %1190 = vmatpush2.msra.mxu0 0.0
    %1191 = vmatprep.subr.mxu0 0.0
    %1192 = vmatpush2.msra.mxu0 0.0
    %1193 = vmatprep.subr.mxu0 0.0
    %1194 = vmatpush2.msra.mxu0 0.0
    %1195 = vmatprep.subr.mxu0 0.0
    %1196 = vmatpush2.msra.mxu0 0.0
    %1197 = vmatprep.subr.mxu0 0.0
    %1198 = vmatpush2.msra.mxu0 0.0
    %1199 = vmatprep.subr.mxu0 0.0
    %1200 = vmatpush2.msra.mxu0 0.0
    %1201 = vmatprep.subr.mxu0 0.0
    %1202 = vmatpush2.msra.mxu0 0.0
    %1203 = vmatprep.subr.mxu0 0.0
    %1204 = vmatpush2.msra.mxu0 0.0
    %1205 = vmatprep.mubr.f32.mxu0 0.0
    %1206 = vmatmul.mubr.f32.gmra.mxu0 %v1139
    %v1207 = vpop.f32.mrf.mxu0
    %v1208 = vadd.f32 0.0, %v1207
    %v1209 = vpop.f32.mrf.mxu0
    %1210 = vdwg.mxu0
    %v1211 = vadd.f32 %v208, %v1208
    %v1212 = vadd.f32 %v183, %v1208
    %v1213 = vxor.u32 %v1211, 2147483648
    %v1214 = vmul.f32 %v1213, 1.442695
    %v1215 = vpow.pop %v1214
    %v1216 = vadd.f32 %v1215, 1.0
    %v1217 = vrcp.pop %v1216
    %v1218 = vmul.f32 1.0, %v1217
    %v1219 = vtanh.pop %v1211
    %v1220 = vmul.f32 %v1218, %v1098
    %1222 = vrot.lane.b32.xlu0 %v1219, 96
    %v1223 = vpop.permute.xlu0 %1222
    %v1225 = vmul.f32 %v1218, %v1223
    %1227 = vrot.lane.b32.xlu0 %v1225, 16
    %v1228 = vpop.permute.xlu0 %1227
    %v1230 = vadd.f32 %v1220, %v1228
    %v1231 = vtanh.pop %v1230
    %1233 = vrot.lane.b32.xlu0 %v1231, 32
    %v1234 = vpop.permute.xlu0 %1233
    %v1236 = vmul.f32 %v1218, %v1234
    %v1237 = vxor.u32 %v1212, 2147483648
    %v1238 = vmul.f32 %v1237, 1.442695
    %v1239 = vpow.pop %v1238
    %v1240 = vadd.f32 %v1239, 1.0
    %v1241 = vrcp.pop %v1240
    %v1242 = vmul.f32 1.0, %v1241
    %v1243 = vtanh.pop %v1212
    %v1244 = vmul.f32 %v1242, %v1122
    %1246 = vrot.lane.b32.xlu0 %v1243, 96
    %v1247 = vpop.permute.xlu0 %1246
    %v1249 = vmul.f32 %v1242, %v1247
    %1251 = vrot.lane.b32.xlu0 %v1249, 16
    %v1252 = vpop.permute.xlu0 %1251
    %v1254 = vadd.f32 %v1244, %v1252
    %v1255 = vtanh.pop %v1254
    %1257 = vrot.lane.b32.xlu0 %v1255, 32
    %v1258 = vpop.permute.xlu0 %1257
    %v1260 = vmul.f32 %v1242, %v1258
    %1262 = vrot.lane.b32.xlu0 %v1260, 32
    %v1263 = vpop.permute.xlu0 %1262
    %v1265 = vsel %vm107, %v339, %v1263
    %v1266 = vsel %vm107, %v471, %v1135
    %v1267 = vsel %vm107, %v603, %v1003
    %v1268 = vsel %vm107, %v735, %v871
    %v1269 = vsel %vm107, %v867, %v739
    %v1270 = vsel %vm107, %v999, %v607
    %v1271 = vsel %vm107, %v1131, %v475
    %1273 = vrot.lane.b32.xlu0 %v1236, 80
    %v1274 = vpop.permute.xlu0 %1273
    %v1276 = vsel %vm107, %v1274, %v343
    %1278 = vrot.lane.b32.xlu0 %v1266, 32
    %v1279 = vpop.permute.xlu0 %1278
    %1282 = vrot.lane.b32.xlu0 %v1267, 64
    %v1283 = vpop.permute.xlu0 %1282
    %1286 = vrot.lane.b32.xlu0 %v1268, 96
    %v1287 = vpop.permute.xlu0 %1286
    %1290 = vrot.lane.b32.xlu0 %v1270, 32
    %v1291 = vpop.permute.xlu0 %1290
    %1294 = vrot.lane.b32.xlu0 %v1271, 64
    %v1295 = vpop.permute.xlu0 %1294
    %1298 = vrot.lane.b32.xlu0 %v1276, 96
    %v1299 = vpop.permute.xlu0 %1298
    %v1301 = vsel %vm213, %v1265, %v1279
    %vm1302 = vcmask 523264
    %v1303 = vsel %vm1302, %v1301, %v1283
    %vm1304 = vcmask 785408
    %v1305 = vsel %vm1304, %v1303, %v1287
    %v1306 = vsel %vm213, %v1269, %v1291
    %v1307 = vsel %vm1302, %v1306, %v1295
    %v1308 = vsel %vm1304, %v1307, %v1299
    %v1309 = vld [vmem:[#allocation5] sm:$0xff]
    %v1311 = vcombine.high %v1309, %v1309
    %v1313 = vmul.f32 %v1305, %v1309
    %v1314 = vmul.f32 %v1308, %v1311
    %v1317 = vcombine.low %v1313, %v1314
    %1319 = vst [vmem:[#allocation10] sm:$0xff] %v1317
    // Predicated region
    $region38: #{tpu_custom_call.1} parent=1 // pred_check
      _
    $region39: #{tpu_custom_call.1} parent=1 // pred_check_branch
      %1321 = sbr.rel (0) target = $region41
    $region40: #{tpu_custom_call.1} parent=1 // pred_region
      %s1323 = ssub.s32 128, 128
      %1324 = vsyncadd [#allocation4], %s1323
      %s1326 = sshll.u32 [#allocation10], 4
      %s1327 = int_to_ptr.vmem [resolvable:$true] %s1326
      %1329 = dma.vmem_to_hbm [thread:$0]  %s1327, 128, %s5, [#allocation4]
    $region41: #{tpu_custom_call.1} parent=1 // pred_fallthru
      _
    // Predicated region
    $region42: #{tpu_custom_call.1} parent=1 // pred_check
      _
    $region43: #{tpu_custom_call.1} parent=1 // pred_check_branch
      %1331 = sbr.rel (0) target = $region45
    $region44: #{tpu_custom_call.1} parent=1 // pred_region
      %1332 = dma.done [#allocation4], 128
    $region45: #{tpu_custom_call.1} parent=1 // pred_fallthru
      _
    %1333 = vsyncpa [#allocation3], 1
    %1334 = vsyncpa [#allocation6], 1
    %1335 = vsyncpa [#allocation9], 1
    %1336 = vsyncpa [#allocation4], 1

</llo_original>
